<compile_context>
chip_gen: v5e
topology: v5e:2x2
jax: 0.10.0
libtpu: 0.0.40
codegen_flags: <defaults>
</compile_context>

<pallas_src>
import functools

import jax
import jax.numpy as jnp
from jax import lax
from jax.experimental import pallas as pl
from jax.experimental.pallas import tpu as pltpu

EPS = 1e-5                    # BatchNorm2d eps in the reference module
ACT_DTYPE = jnp.bfloat16      # activation / weight dtype fed to the MXU


# --------------------------------------------------------------------------
# Pallas kernels
# --------------------------------------------------------------------------
def _mm_bn_kernel(x_ref, w_ref, g_ref, b_ref, m_ref, o_ref, sum_ref, sq_ref,
                  *, inv_rows, eps):
    """One fused conv group: (rows, K) @ (K, C) + train-mode BN + per-channel ReLU.

    grid = (2, n_row_tiles):
      phase 0: compute the matmul for this row tile, accumulate per-channel
               sum / sum-of-squares into VMEM scratch (global over all tiles).
      phase 1: recompute the matmul, normalize with the global stats, apply the
               per-channel ReLU mask and store.
    """
    phase = pl.program_id(0)
    tile = pl.program_id(1)

    @pl.when(jnp.logical_and(phase == 0, tile == 0))
    def _init():
        sum_ref[...] = jnp.zeros_like(sum_ref)
        sq_ref[...] = jnp.zeros_like(sq_ref)

    # bf16 x bf16 -> f32 accumulation on the MXU.
    acc = jnp.dot(x_ref[...], w_ref[...], preferred_element_type=jnp.float32)

    @pl.when(phase == 0)
    def _accumulate():
        sum_ref[...] = sum_ref[...] + jnp.sum(acc, axis=0, keepdims=True)
        sq_ref[...] = sq_ref[...] + jnp.sum(acc * acc, axis=0, keepdims=True)
        o_ref[...] = acc.astype(o_ref.dtype)       # overwritten in phase 1

    @pl.when(phase == 1)
    def _normalize():
        mean = sum_ref[...] * inv_rows                              # (1, C)
        var = jnp.maximum(sq_ref[...] * inv_rows - mean * mean, 0.0)
        bn_scale = g_ref[...] * lax.rsqrt(var + eps)                # (1, C)
        y = (acc - mean) * bn_scale + b_ref[...]
        m = m_ref[...]                                              # 1.0 = ReLU
        y = m * jnp.maximum(y, 0.0) + (1.0 - m) * y
        o_ref[...] = y.astype(o_ref.dtype)


def _mm_bn_fuse_kernel(x_ref, w_ref, g_ref, b_ref, s_ref, o_ref, sum_ref, sq_ref,
                       *, inv_rows, eps, res_scale):
    """out_conv (1x1) + BN + relu(out*scale + shortcut), same two-phase scheme."""
    phase = pl.program_id(0)
    tile = pl.program_id(1)

    @pl.when(jnp.logical_and(phase == 0, tile == 0))
    def _init():
        sum_ref[...] = jnp.zeros_like(sum_ref)
        sq_ref[...] = jnp.zeros_like(sq_ref)

    acc = jnp.dot(x_ref[...], w_ref[...], preferred_element_type=jnp.float32)

    @pl.when(phase == 0)
    def _accumulate():
        sum_ref[...] = sum_ref[...] + jnp.sum(acc, axis=0, keepdims=True)
        sq_ref[...] = sq_ref[...] + jnp.sum(acc * acc, axis=0, keepdims=True)
        o_ref[...] = acc.astype(o_ref.dtype)

    @pl.when(phase == 1)
    def _finalize():
        mean = sum_ref[...] * inv_rows
        var = jnp.maximum(sq_ref[...] * inv_rows - mean * mean, 0.0)
        bn = (acc - mean) * (g_ref[...] * lax.rsqrt(var + eps)) + b_ref[...]
        y = jnp.maximum(bn * res_scale + s_ref[...].astype(jnp.float32), 0.0)
        o_ref[...] = y.astype(o_ref.dtype)


# --------------------------------------------------------------------------
# pallas_call wrappers
# --------------------------------------------------------------------------
def _pick_tile(rows, cap=1024):
    """Largest row tile (multiple of 8, <= cap) that divides `rows` exactly."""
    if rows <= cap:
        return rows
    for t in range(cap, 7, -8):
        if rows % t == 0:
            return t
    return rows  # fallback: single tile


def _compiler_params():
    return pltpu.CompilerParams(
        dimension_semantics=("arbitrary", "arbitrary"),
        vmem_limit_bytes=64 * 1024 * 1024,
    )


def mm_bn(x2, w, gamma, beta, relu_mask, *, out_dtype):
    """x2: (rows, K) bf16, w: (K, C) bf16, gamma/beta/relu_mask: (1, C) f32."""
    rows, K = x2.shape
    C = w.shape[1]
    tile = _pick_tile(rows)
    n_tiles = rows // tile
    kern = functools.partial(_mm_bn_kernel, inv_rows=1.0 / rows, eps=EPS)
    cost = pl.CostEstimate(
        flops=int(4 * rows * K * C),
        transcendentals=0,
        bytes_accessed=int(2 * rows * K * x2.dtype.itemsize
                           + 2 * rows * C * jnp.dtype(out_dtype).itemsize
                           + K * C * w.dtype.itemsize),
    )
    return pl.pallas_call(
        kern,
        out_shape=jax.ShapeDtypeStruct((rows, C), out_dtype),
        grid_spec=pltpu.PrefetchScalarGridSpec(
            num_scalar_prefetch=0,
            grid=(2, n_tiles),
            in_specs=[
                pl.BlockSpec((tile, K), lambda p, t: (t, 0)),
                pl.BlockSpec((K, C), lambda p, t: (0, 0)),
                pl.BlockSpec((1, C), lambda p, t: (0, 0)),
                pl.BlockSpec((1, C), lambda p, t: (0, 0)),
                pl.BlockSpec((1, C), lambda p, t: (0, 0)),
            ],
            out_specs=pl.BlockSpec((tile, C), lambda p, t: (t, 0)),
            scratch_shapes=[pltpu.VMEM((1, C), jnp.float32),
                            pltpu.VMEM((1, C), jnp.float32)],
        ),
        compiler_params=_compiler_params(),
        cost_estimate=cost,
    )(x2, w, gamma, beta, relu_mask)


def mm_bn_fuse(x2, w, gamma, beta, shortcut, *, res_scale, out_dtype):
    """out_conv + BN + relu(out*scale + shortcut). shortcut: (rows, C)."""
    rows, K = x2.shape
    C = w.shape[1]
    tile = _pick_tile(rows)
    n_tiles = rows // tile
    kern = functools.partial(_mm_bn_fuse_kernel, inv_rows=1.0 / rows, eps=EPS,
                             res_scale=res_scale)
    cost = pl.CostEstimate(
        flops=int(4 * rows * K * C),
        transcendentals=0,
        bytes_accessed=int(2 * rows * K * x2.dtype.itemsize
                           + rows * C * shortcut.dtype.itemsize
                           + 2 * rows * C * jnp.dtype(out_dtype).itemsize),
    )
    return pl.pallas_call(
        kern,
        out_shape=jax.ShapeDtypeStruct((rows, C), out_dtype),
        grid_spec=pltpu.PrefetchScalarGridSpec(
            num_scalar_prefetch=0,
            grid=(2, n_tiles),
            in_specs=[
                pl.BlockSpec((tile, K), lambda p, t: (t, 0)),
                pl.BlockSpec((K, C), lambda p, t: (0, 0)),
                pl.BlockSpec((1, C), lambda p, t: (0, 0)),
                pl.BlockSpec((1, C), lambda p, t: (0, 0)),
                pl.BlockSpec((tile, C), lambda p, t: (t, 0)),
            ],
            out_specs=pl.BlockSpec((tile, C), lambda p, t: (t, 0)),
            scratch_shapes=[pltpu.VMEM((1, C), jnp.float32),
                            pltpu.VMEM((1, C), jnp.float32)],
        ),
        compiler_params=_compiler_params(),
        cost_estimate=cost,
    )(x2, w, gamma, beta, shortcut)


# --------------------------------------------------------------------------
# XLA-side glue: im2col, weight packing
# --------------------------------------------------------------------------
def _im2col(x, ks, padding, dilation):
    """x: (N,H,W,C) -> (N*Ho*Wo, KH*KW*C), tap-major then channel, stride 1."""
    KH, KW = ks
    ph, pw = padding
    dh, dw = dilation
    N, H, W, C = x.shape
    if ph or pw:
        x = jnp.pad(x, ((0, 0), (ph, ph), (pw, pw), (0, 0)))
    Hp, Wp = H + 2 * ph, W + 2 * pw
    Ho = Hp - dh * (KH - 1)
    Wo = Wp - dw * (KW - 1)
    if KH == 1 and KW == 1:
        return x.reshape(N * Ho * Wo, C), (N, Ho, Wo)
    cols = []
    for i in range(KH):
        for j in range(KW):
            cols.append(lax.slice(x, (0, i * dh, j * dw, 0),
                                  (N, i * dh + Ho, j * dw + Wo, C)))
    patches = jnp.concatenate(cols, axis=-1)              # (N,Ho,Wo,KH*KW*C)
    return patches.reshape(N * Ho * Wo, KH * KW * C), (N, Ho, Wo)


def _block_diag(ws):
    """Block-diagonal stack of (K_i, C_i) weight matrices."""
    Kt = sum(w.shape[0] for w in ws)
    Ct = sum(w.shape[1] for w in ws)
    out = jnp.zeros((Kt, Ct), jnp.float32)
    ko = co = 0
    for w in ws:
        out = out.at[ko:ko + w.shape[0], co:co + w.shape[1]].set(w)
        ko += w.shape[0]
        co += w.shape[1]
    return out


def _cat_bn(ps):
    g = jnp.concatenate([p["gamma"] for p in ps], axis=1)
    b = jnp.concatenate([p["beta"] for p in ps], axis=1)
    m = jnp.concatenate(
        [jnp.full((1, p["w"].shape[1]), 1.0 if p["relu"] else 0.0, jnp.float32)
         for p in ps], axis=1)
    return g, b, m


# --------------------------------------------------------------------------
# Parameters
# --------------------------------------------------------------------------
def make_conv_params(key, cin, cout, kh, kw, padding=(0, 0), dilation=(1, 1),
                     relu=True):
    # Conv bias is intentionally omitted: under train-mode BatchNorm the
    # per-channel bias cancels exactly in (x - mean).
    k1, k2, k3 = jax.random.split(key, 3)
    fan_in = cin * kh * kw
    return dict(
        w=jax.random.normal(k1, (kh * kw * cin, cout), jnp.float32)
          / jnp.sqrt(jnp.float32(fan_in)),            # rows ordered (tap, cin)
        gamma=1.0 + 0.1 * jax.random.normal(k2, (1, cout), jnp.float32),
        beta=0.1 * jax.random.normal(k3, (1, cout), jnp.float32),
        ks=(kh, kw), padding=padding, dilation=dilation, relu=relu,
    )


def build_rfb4_params(key, in_planes, out_planes):
    inter = in_planes // 4
    keys = iter(jax.random.split(key, 16))

    def mk(cin, cout, kh, kw, **kw_args):
        return make_conv_params(next(keys), cin, cout, kh, kw, **kw_args)

    return {
        "branch0": [
            mk(in_planes, inter, 1, 1),
            mk(inter, inter, 3, 3, padding=(1, 1), relu=False),
        ],
        "branch1": [
            mk(in_planes, inter, 1, 1),
            mk(inter, inter, 3, 1, padding=(1, 0)),
            mk(inter, inter, 3, 3, padding=(3, 3), dilation=(3, 3), relu=False),
        ],
        "branch2": [
            mk(in_planes, inter, 1, 1),
            mk(inter, inter, 1, 3, padding=(0, 1)),
            mk(inter, inter, 3, 3, padding=(3, 3), dilation=(3, 3), relu=False),
        ],
        "branch3": [
            mk(in_planes, inter // 2, 1, 1),
            mk(inter // 2, inter // 4 * 3, 1, 3, padding=(0, 1)),
            mk(inter // 4 * 3, inter, 3, 1, padding=(1, 0)),
            mk(inter, inter, 3, 3, padding=(5, 5), dilation=(5, 5), relu=False),
        ],
        "out_conv": [mk(4 * inter, out_planes, 1, 1, relu=False)],
        "shortcut": [mk(in_planes, out_planes, 1, 1, relu=False)],
    }


# --------------------------------------------------------------------------
# Forward
# --------------------------------------------------------------------------
def rfb4_forward(x_nchw, params, scale=0.1):
    """RFB4 forward (train-mode BN). Input/output NCHW like the PyTorch module."""
    N, Cin, H, W = x_nchw.shape
    rows = N * H * W
    x_nhwc = jnp.transpose(x_nchw.astype(jnp.float32), (0, 2, 3, 1))
    x2 = x_nhwc.reshape(rows, Cin).astype(ACT_DTYPE)

    b0, b1, b2, b3 = (params["branch0"], params["branch1"],
                      params["branch2"], params["branch3"])
    p_out = params["out_conv"][0]
    p_sc = params["shortcut"][0]

    def img(t):
        return t.reshape(N, H, W, t.shape[1])

    # ---- stage 1: four branch-stem 1x1 convs + shortcut 1x1, one matmul ----
    stems = [b0[0], b1[0], b2[0], b3[0], p_sc]
    w1 = jnp.concatenate([p["w"] for p in stems], axis=1).astype(ACT_DTYPE)
    g1, be1, mk1 = _cat_bn(stems)
    S = mm_bn(x2, w1, g1, be1, mk1, out_dtype=ACT_DTYPE)
    sizes = [p["w"].shape[1] for p in stems]
    offs = [0]
    for s in sizes:
        offs.append(offs[-1] + s)
    b0s = S[:, offs[0]:offs[1]]
    b1s = S[:, offs[1]:offs[2]]
    b2s = S[:, offs[2]:offs[3]]
    b3s = S[:, offs[3]:offs[4]]
    short = S[:, offs[4]:offs[5]]

    # ---- stage 2: branch1 (3,1), branch2 (1,3), branch3 (1,3) mid convs ----
    mids = [(b1[1], img(b1s)), (b2[1], img(b2s)), (b3[1], img(b3s))]
    xm = jnp.concatenate(
        [_im2col(t, p["ks"], p["padding"], p["dilation"])[0] for p, t in mids],
        axis=1)
    wm = _block_diag([p["w"] for p, _ in mids]).astype(ACT_DTYPE)
    gm, bem, mkm = _cat_bn([p for p, _ in mids])
    M = mm_bn(xm, wm, gm, bem, mkm, out_dtype=ACT_DTYPE)
    c1 = b1[1]["w"].shape[1]
    c2 = b2[1]["w"].shape[1]
    b1m = M[:, :c1]
    b2m = M[:, c1:c1 + c2]
    b3m1 = M[:, c1 + c2:]

    # ---- stage 3: branch3 (3,1) mid conv ----
    p32 = b3[2]
    x32, _ = _im2col(img(b3m1), p32["ks"], p32["padding"], p32["dilation"])
    g32, be32, mk32 = _cat_bn([p32])
    b3m2 = mm_bn(x32, p32["w"].astype(ACT_DTYPE), g32, be32, mk32,
                 out_dtype=ACT_DTYPE)

    # ---- stage 4: four 3x3 branch-final convs -> concat x0|x1|x2|x3 directly ----
    fins = [(b0[1], img(b0s)), (b1[2], img(b1m)),
            (b2[2], img(b2m)), (b3[3], img(b3m2))]
    xf = jnp.concatenate(
        [_im2col(t, p["ks"], p["padding"], p["dilation"])[0] for p, t in fins],
        axis=1)
    wf = _block_diag([p["w"] for p, _ in fins]).astype(ACT_DTYPE)
    gf, bef, mkf = _cat_bn([p for p, _ in fins])
    cat = mm_bn(xf, wf, gf, bef, mkf, out_dtype=ACT_DTYPE)   # (rows, 4*inter)

    # ---- stage 5: out_conv 1x1 + BN + relu(out*scale + shortcut) ----
    out2 = mm_bn_fuse(cat, p_out["w"].astype(ACT_DTYPE), p_out["gamma"],
                      p_out["beta"], short, res_scale=scale,
                      out_dtype=jnp.float32)                 # (rows, out_planes)

    return jnp.transpose(out2.reshape(N, H, W, -1), (0, 3, 1, 2))


# --------------------------------------------------------------------------
# Demo
# --------------------------------------------------------------------------
if __name__ == "__main__":
    key = jax.random.PRNGKey(0)
    k_x, k_p = jax.random.split(key)

    N, C, H, W = 2, 16, 16, 16          # in_planes=16 -> inter_planes=4
    out_planes = 16

    x = jax.random.normal(k_x, (N, C, H, W), jnp.float32)
    params = build_rfb4_params(k_p, in_planes=C, out_planes=out_planes)

    y = rfb4_forward(x, params, scale=0.1)
    y = jax.block_until_ready(y)

    assert y.shape == (N, out_planes, H, W), y.shape
    assert bool(jnp.all(jnp.isfinite(y))) and bool(jnp.all(y >= 0.0))
    print("KERNEL_OK")
</pallas_src>

<mosaic_0001>
module attributes {stable_mosaic.version = 11 : i64} {
  func.func @_mm_bn_kernel(%arg0: i32, %arg1: i32, %arg2: memref<512x16xbf16, #tpu.memory_space<vmem>>, %arg3: memref<16x30xbf16, #tpu.memory_space<vmem>>, %arg4: memref<1x30xf32, #tpu.memory_space<vmem>>, %arg5: memref<1x30xf32, #tpu.memory_space<vmem>>, %arg6: memref<1x30xf32, #tpu.memory_space<vmem>>, %arg7: memref<512x30xbf16, #tpu.memory_space<vmem>>, %arg8: memref<1x30xf32, #tpu.memory_space<vmem>>, %arg9: memref<1x30xf32, #tpu.memory_space<vmem>>) attributes {dimension_semantics = [#tpu.dimension_semantics<arbitrary>, #tpu.dimension_semantics<arbitrary>], iteration_bounds = array<i64: 2, 1>, scalar_prefetch = 0 : i64, scratch_operands = 2 : i64, tpu.core_type = #tpu.core_type<tc>, window_params = [{transform_indices = @transform_0, window_bounds = array<i64: 512, 16>}, {pipeline_mode = #tpu.pipeline_mode<synchronous>, transform_indices = @transform_1, window_bounds = array<i64: 16, 30>}, {pipeline_mode = #tpu.pipeline_mode<synchronous>, transform_indices = @transform_2, window_bounds = array<i64: 1, 30>}, {pipeline_mode = #tpu.pipeline_mode<synchronous>, transform_indices = @transform_3, window_bounds = array<i64: 1, 30>}, {pipeline_mode = #tpu.pipeline_mode<synchronous>, transform_indices = @transform_4, window_bounds = array<i64: 1, 30>}, {transform_indices = @transform_5, window_bounds = array<i64: 512, 30>}]} {
    %c0_i32 = arith.constant 0 : i32
    %0 = arith.cmpi eq, %arg0, %c0_i32 : i32
    %c0_i32_0 = arith.constant 0 : i32
    %1 = arith.cmpi eq, %arg1, %c0_i32_0 : i32
    %2 = arith.andi %0, %1 : i1
    %3 = arith.extui %2 : i1 to i32
    %c0_i32_1 = arith.constant 0 : i32
    %4 = arith.cmpi ne, %3, %c0_i32_1 : i32
    scf.if %4 {
      %cst_8 = arith.constant 0.000000e+00 : f32
      %14 = vector.broadcast %cst_8 : f32 to vector<1x30xf32>
      %c0_9 = arith.constant 0 : index
      %c0_10 = arith.constant 0 : index
      %15 = vector.load %arg8[%c0_9, %c0_10] : memref<1x30xf32, #tpu.memory_space<vmem>>, vector<1x30xf32>
      tpu.vector_store %arg8[%c0_9, %c0_10], %14 {strides = array<i32>} : memref<1x30xf32, #tpu.memory_space<vmem>>, vector<1x30xf32>,
      %cst_11 = arith.constant 0.000000e+00 : f32
      %16 = vector.broadcast %cst_11 : f32 to vector<1x30xf32>
      %c0_12 = arith.constant 0 : index
      %c0_13 = arith.constant 0 : index
      %17 = vector.load %arg9[%c0_12, %c0_13] : memref<1x30xf32, #tpu.memory_space<vmem>>, vector<1x30xf32>
      tpu.vector_store %arg9[%c0_12, %c0_13], %16 {strides = array<i32>} : memref<1x30xf32, #tpu.memory_space<vmem>>, vector<1x30xf32>,
    } else {
    }
    %c0 = arith.constant 0 : index
    %c0_2 = arith.constant 0 : index
    %5 = vector.load %arg2[%c0, %c0_2] : memref<512x16xbf16, #tpu.memory_space<vmem>>, vector<512x16xbf16>
    %c0_3 = arith.constant 0 : index
    %c0_4 = arith.constant 0 : index
    %6 = vector.load %arg3[%c0_3, %c0_4] : memref<16x30xbf16, #tpu.memory_space<vmem>>, vector<16x30xbf16>
    %cst = arith.constant dense<0.000000e+00> : vector<512x30xf32>
    %7 = tpu.matmul %5, %6, %cst {dimension_numbers = #tpu.dot_dimension_numbers<[1], [0], [0], [1], [0, 0, 1, 1], [], []>} : vector<512x16xbf16>, vector<16x30xbf16>, vector<512x30xf32> -> vector<512x30xf32>
    %c0_i32_5 = arith.constant 0 : i32
    %8 = arith.cmpi eq, %arg0, %c0_i32_5 : i32
    %9 = arith.extui %8 : i1 to i32
    %c0_i32_6 = arith.constant 0 : i32
    %10 = arith.cmpi ne, %9, %c0_i32_6 : i32
    scf.if %10 {
      %c0_8 = arith.constant 0 : index
      %c0_9 = arith.constant 0 : index
      %14 = vector.load %arg8[%c0_8, %c0_9] : memref<1x30xf32, #tpu.memory_space<vmem>>, vector<1x30xf32>
      %cst_10 = arith.constant dense<0.000000e+00> : vector<30xf32>
      %15 = vector.multi_reduction <add>, %7, %cst_10 [0] : vector<512x30xf32> to vector<30xf32>
      %16 = vector.shape_cast %15 : vector<30xf32> to vector<1x30xf32>
      %17 = arith.addf %14, %16 : vector<1x30xf32>
      %c0_11 = arith.constant 0 : index
      %c0_12 = arith.constant 0 : index
      %18 = vector.load %arg8[%c0_11, %c0_12] : memref<1x30xf32, #tpu.memory_space<vmem>>, vector<1x30xf32>
      tpu.vector_store %arg8[%c0_11, %c0_12], %17 {strides = array<i32>} : memref<1x30xf32, #tpu.memory_space<vmem>>, vector<1x30xf32>,
      %c0_13 = arith.constant 0 : index
      %c0_14 = arith.constant 0 : index
      %19 = vector.load %arg9[%c0_13, %c0_14] : memref<1x30xf32, #tpu.memory_space<vmem>>, vector<1x30xf32>
      %20 = arith.mulf %7, %7 : vector<512x30xf32>
      %cst_15 = arith.constant dense<0.000000e+00> : vector<30xf32>
      %21 = vector.multi_reduction <add>, %20, %cst_15 [0] : vector<512x30xf32> to vector<30xf32>
      %22 = vector.shape_cast %21 : vector<30xf32> to vector<1x30xf32>
      %23 = arith.addf %19, %22 : vector<1x30xf32>
      %c0_16 = arith.constant 0 : index
      %c0_17 = arith.constant 0 : index
      %24 = vector.load %arg9[%c0_16, %c0_17] : memref<1x30xf32, #tpu.memory_space<vmem>>, vector<1x30xf32>
      tpu.vector_store %arg9[%c0_16, %c0_17], %23 {strides = array<i32>} : memref<1x30xf32, #tpu.memory_space<vmem>>, vector<1x30xf32>,
      %25 = arith.truncf %7 : vector<512x30xf32> to vector<512x30xbf16>
      %c0_18 = arith.constant 0 : index
      %c0_19 = arith.constant 0 : index
      %26 = vector.load %arg7[%c0_18, %c0_19] : memref<512x30xbf16, #tpu.memory_space<vmem>>, vector<512x30xbf16>
      tpu.vector_store %arg7[%c0_18, %c0_19], %25 {strides = array<i32>} : memref<512x30xbf16, #tpu.memory_space<vmem>>, vector<512x30xbf16>,
    } else {
    }
    %c1_i32 = arith.constant 1 : i32
    %11 = arith.cmpi eq, %arg0, %c1_i32 : i32
    %12 = arith.extui %11 : i1 to i32
    %c0_i32_7 = arith.constant 0 : i32
    %13 = arith.cmpi ne, %12, %c0_i32_7 : i32
    scf.if %13 {
      %c0_8 = arith.constant 0 : index
      %c0_9 = arith.constant 0 : index
      %14 = vector.load %arg8[%c0_8, %c0_9] : memref<1x30xf32, #tpu.memory_space<vmem>>, vector<1x30xf32>
      %cst_10 = arith.constant 0.001953125 : f32
      %15 = vector.broadcast %cst_10 : f32 to vector<1x30xf32>
      %16 = arith.mulf %14, %15 : vector<1x30xf32>
      %c0_11 = arith.constant 0 : index
      %c0_12 = arith.constant 0 : index
      %17 = vector.load %arg9[%c0_11, %c0_12] : memref<1x30xf32, #tpu.memory_space<vmem>>, vector<1x30xf32>
      %cst_13 = arith.constant 0.001953125 : f32
      %18 = vector.broadcast %cst_13 : f32 to vector<1x30xf32>
      %19 = arith.mulf %17, %18 : vector<1x30xf32>
      %20 = arith.mulf %16, %16 : vector<1x30xf32>
      %21 = arith.subf %19, %20 : vector<1x30xf32>
      %cst_14 = arith.constant 0.000000e+00 : f32
      %22 = vector.broadcast %cst_14 : f32 to vector<1x30xf32>
      %23 = arith.maximumf %21, %22 : vector<1x30xf32>
      %c0_15 = arith.constant 0 : index
      %c0_16 = arith.constant 0 : index
      %24 = vector.load %arg4[%c0_15, %c0_16] : memref<1x30xf32, #tpu.memory_space<vmem>>, vector<1x30xf32>
      %cst_17 = arith.constant 9.99999974E-6 : f32
      %25 = vector.broadcast %cst_17 : f32 to vector<1x30xf32>
      %26 = arith.addf %23, %25 : vector<1x30xf32>
      %27 = math.rsqrt %26 : vector<1x30xf32>
      %28 = arith.mulf %24, %27 : vector<1x30xf32>
      %29 = vector.broadcast %16 : vector<1x30xf32> to vector<512x30xf32>
      %30 = arith.subf %7, %29 : vector<512x30xf32>
      %31 = vector.broadcast %28 : vector<1x30xf32> to vector<512x30xf32>
      %32 = arith.mulf %30, %31 : vector<512x30xf32>
      %c0_18 = arith.constant 0 : index
      %c0_19 = arith.constant 0 : index
      %33 = vector.load %arg5[%c0_18, %c0_19] : memref<1x30xf32, #tpu.memory_space<vmem>>, vector<1x30xf32>
      %34 = vector.broadcast %33 : vector<1x30xf32> to vector<512x30xf32>
      %35 = arith.addf %32, %34 : vector<512x30xf32>
      %c0_20 = arith.constant 0 : index
      %c0_21 = arith.constant 0 : index
      %36 = vector.load %arg6[%c0_20, %c0_21] : memref<1x30xf32, #tpu.memory_space<vmem>>, vector<1x30xf32>
      %cst_22 = arith.constant 0.000000e+00 : f32
      %37 = vector.broadcast %cst_22 : f32 to vector<512x30xf32>
      %38 = arith.maximumf %35, %37 : vector<512x30xf32>
      %39 = vector.broadcast %36 : vector<1x30xf32> to vector<512x30xf32>
      %40 = arith.mulf %39, %38 : vector<512x30xf32>
      %cst_23 = arith.constant 1.000000e+00 : f32
      %41 = vector.broadcast %cst_23 : f32 to vector<1x30xf32>
      %42 = arith.subf %41, %36 : vector<1x30xf32>
      %43 = vector.broadcast %42 : vector<1x30xf32> to vector<512x30xf32>
      %44 = arith.mulf %43, %35 : vector<512x30xf32>
      %45 = arith.addf %40, %44 : vector<512x30xf32>
      %46 = arith.truncf %45 : vector<512x30xf32> to vector<512x30xbf16>
      %c0_24 = arith.constant 0 : index
      %c0_25 = arith.constant 0 : index
      %47 = vector.load %arg7[%c0_24, %c0_25] : memref<512x30xbf16, #tpu.memory_space<vmem>>, vector<512x30xbf16>
      tpu.vector_store %arg7[%c0_24, %c0_25], %46 {strides = array<i32>} : memref<512x30xbf16, #tpu.memory_space<vmem>>, vector<512x30xbf16>,
    } else {
    }
    return
  }
  func.func @transform_0(%arg0: i32, %arg1: i32) -> (i32, i32) {
    %c0_i32 = arith.constant 0 : i32
    %c0_i32_0 = arith.constant 0 : i32
    return %arg1, %c0_i32 : i32, i32
  }
  func.func @transform_1(%arg0: i32, %arg1: i32) -> (i32, i32) {
    %c0_i32 = arith.constant 0 : i32
    %c0_i32_0 = arith.constant 0 : i32
    %c0_i32_1 = arith.constant 0 : i32
    return %c0_i32, %c0_i32_0 : i32, i32
  }
  func.func @transform_2(%arg0: i32, %arg1: i32) -> (i32, i32) {
    %c0_i32 = arith.constant 0 : i32
    %c0_i32_0 = arith.constant 0 : i32
    %c0_i32_1 = arith.constant 0 : i32
    return %c0_i32, %c0_i32_0 : i32, i32
  }
  func.func @transform_3(%arg0: i32, %arg1: i32) -> (i32, i32) {
    %c0_i32 = arith.constant 0 : i32
    %c0_i32_0 = arith.constant 0 : i32
    %c0_i32_1 = arith.constant 0 : i32
    return %c0_i32, %c0_i32_0 : i32, i32
  }
  func.func @transform_4(%arg0: i32, %arg1: i32) -> (i32, i32) {
    %c0_i32 = arith.constant 0 : i32
    %c0_i32_0 = arith.constant 0 : i32
    %c0_i32_1 = arith.constant 0 : i32
    return %c0_i32, %c0_i32_0 : i32, i32
  }
  func.func @transform_5(%arg0: i32, %arg1: i32) -> (i32, i32) {
    %c0_i32 = arith.constant 0 : i32
    %c0_i32_0 = arith.constant 0 : i32
    return %arg1, %c0_i32 : i32, i32
  }
}

</mosaic_0001>

<llo_original>
// kernel: tpu_custom_call.1
$region0: #{tpu_custom_call.1}
  #allocation0 [shape = 'u32[]', space=smem, size = 0x4, offset = 0x4, fixed_abs, tag = 'smem constant byte address 0x4 - core index']
  #allocation1 [shape = 'u32[72,128]{1,0:T(1,128)}', space=vmem, size = 0x9000, scoped, tag = 'internal scratch']
  #allocation2 [shape = 'f32[1,30]{1,0:T(1,128)}', space=vmem, size = 0x200, scoped, tag = 'scratch operand']
  #allocation3 [shape = 'f32[1,30]{1,0:T(1,128)}', space=vmem, size = 0x200, scoped, tag = 'scratch operand']
  %s0 = inlined_call_operand.vmem [shape: bf16[512,16], index: 0, kind: input, shape index: {}]
  %s1 = inlined_call_operand.vmem [shape: bf16[16,30], index: 1, kind: input, shape index: {}]
  %s2 = inlined_call_operand.vmem [shape: f32[1,30], index: 2, kind: input, shape index: {}]
  %s3 = inlined_call_operand.vmem [shape: f32[1,30], index: 3, kind: input, shape index: {}]
  %s4 = inlined_call_operand.vmem [shape: f32[1,30], index: 4, kind: input, shape index: {}]
  %s5 = inlined_call_operand.vmem [shape: bf16[512,30], index: 5, kind: output, shape index: {}]
  %s6 = sld [smem:[#allocation0]]
  $region65: #{tpu_custom_call.1} parent=0
    _
  %s8 = ssub.s32 1, %s6
  %s9 = scalar_select 0, %s8, %s6
  loop: start=0, step=1, limit=4
  $region2: #{tpu_custom_call.1} parent=0 // loop_pre_header
    _
  $region3: #{tpu_custom_call.1} parent=0 // loop_header
    %s11 = sphi 0, %s15
    %p12 = scmp.ge.s32.totalorder %s11, 4
    %s18 = sphi 0, %s30
    %s19 = sphi 0, %s26
    %s20 = sphi 0, %s18
    %s21 = sphi 0, %s19
    %s22 = sphi 0, %s20
    %s23 = sphi 0, %s21
    %s33 = sphi 0, %s35
    %s36 = sphi 0, %s33
    %s37 = sphi 0, %s36
    %s53 = sphi 0, %s37
    %s57 = sphi 0, %s57
    %s59 = sphi 0, %s57
    %s60 = sphi 0, %s59
    %s74 = sphi 0, %s60
    %s78 = sphi 0, %s78
    %s80 = sphi 0, %s78
    %s81 = sphi 0, %s80
    %s95 = sphi 0, %s81
    %s99 = sphi 0, %s99
    %s101 = sphi 0, %s99
    %s102 = sphi 0, %s101
    %s116 = sphi 0, %s102
    %s120 = sphi 0, %s120
    %s122 = sphi 0, %s120
    %s123 = sphi 0, %s122
    %s137 = sphi 0, %s123
    %s143 = sphi 0, %s145
    %s146 = sphi 0, %s143
    %s147 = sphi 0, %s146
    %s163 = sphi 0, %s147
  $region4: #{tpu_custom_call.1} parent=0 // loop_header_branch
    %14 = sbr.rel (%p12) target = $region8
  $region5: #{tpu_custom_call.1} parent=0 // loop_body
    %s16 = ssub.s32 %s11, 1
    %s17 = ssub.s32 %s11, 2
    %s24 = sadd.s32 1, %s19
    %p25 = scmp.ge.s32.totalorder %s24, 1
    %s26 = scalar_select %p25, 0, %s24
    %s27 = sadd.s32 1, %s18
    %s28 = scalar_select %p25, %s27, %s18
    %p29 = scmp.ge.s32.totalorder %s28, 2
    %s30 = scalar_select %p29, 0, %s28
    %s31 = ssub.s32 %s19, %s26
    %p32 = scmp.eq.s32.totalorder %s31, 0
    %s34 = sadd.s32 %s33, 1
    %s35 = scalar_select %p32, %s33, %s34
    %p38 = pneg %p32
    %p39 = scmp.eq.s32.totalorder %s11, 1
    %p40 = por %p38, %p39
    %p41 = scmp.ne.s32.totalorder %s33, %s36
    %p42 = scmp.eq.s32.totalorder %s11, 0
    %p43 = por %p41, %p42
    %p44 = scmp.ne.s32.totalorder %s33, %s36
    %p45 = scmp.eq.s32.totalorder %s16, 1
    %p46 = por %p44, %p45
    %p47 = scmp.ne.s32.totalorder %s36, %s37
    %p48 = scmp.eq.s32.totalorder %s16, 0
    %p49 = por %p47, %p48
    %p50 = scmp.ne.s32.totalorder %s36, %s37
    %p51 = scmp.eq.s32.totalorder %s17, 1
    %p52 = por %p50, %p51
    %p54 = scmp.ne.s32.totalorder %s37, %s53
    %p55 = scmp.eq.s32.totalorder %s17, 0
    %p56 = por %p54, %p55
    %s58 = sadd.s32 %s57, 1
    %p61 = scmp.eq.s32.totalorder %s11, 1
    %p62 = scmp.ne.s32.totalorder %s57, %s59
    %p63 = scmp.eq.s32.totalorder %s11, 0
    %p64 = por %p62, %p63
    %p65 = scmp.ne.s32.totalorder %s57, %s59
    %p66 = scmp.eq.s32.totalorder %s16, 1
    %p67 = por %p65, %p66
    %p68 = scmp.ne.s32.totalorder %s59, %s60
    %p69 = scmp.eq.s32.totalorder %s16, 0
    %p70 = por %p68, %p69
    %p71 = scmp.ne.s32.totalorder %s59, %s60
    %p72 = scmp.eq.s32.totalorder %s17, 1
    %p73 = por %p71, %p72
    %p75 = scmp.ne.s32.totalorder %s60, %s74
    %p76 = scmp.eq.s32.totalorder %s17, 0
    %p77 = por %p75, %p76
    %s79 = sadd.s32 %s78, 1
    %p82 = scmp.eq.s32.totalorder %s11, 1
    %p83 = scmp.ne.s32.totalorder %s78, %s80
    %p84 = scmp.eq.s32.totalorder %s11, 0
    %p85 = por %p83, %p84
    %p86 = scmp.ne.s32.totalorder %s78, %s80
    %p87 = scmp.eq.s32.totalorder %s16, 1
    %p88 = por %p86, %p87
    %p89 = scmp.ne.s32.totalorder %s80, %s81
    %p90 = scmp.eq.s32.totalorder %s16, 0
    %p91 = por %p89, %p90
    %p92 = scmp.ne.s32.totalorder %s80, %s81
    %p93 = scmp.eq.s32.totalorder %s17, 1
    %p94 = por %p92, %p93
    %p96 = scmp.ne.s32.totalorder %s81, %s95
    %p97 = scmp.eq.s32.totalorder %s17, 0
    %p98 = por %p96, %p97
    %s100 = sadd.s32 %s99, 1
    %p103 = scmp.eq.s32.totalorder %s11, 1
    %p104 = scmp.ne.s32.totalorder %s99, %s101
    %p105 = scmp.eq.s32.totalorder %s11, 0
    %p106 = por %p104, %p105
    %p107 = scmp.ne.s32.totalorder %s99, %s101
    %p108 = scmp.eq.s32.totalorder %s16, 1
    %p109 = por %p107, %p108
    %p110 = scmp.ne.s32.totalorder %s101, %s102
    %p111 = scmp.eq.s32.totalorder %s16, 0
    %p112 = por %p110, %p111
    %p113 = scmp.ne.s32.totalorder %s101, %s102
    %p114 = scmp.eq.s32.totalorder %s17, 1
    %p115 = por %p113, %p114
    %p117 = scmp.ne.s32.totalorder %s102, %s116
    %p118 = scmp.eq.s32.totalorder %s17, 0
    %p119 = por %p117, %p118
    %s121 = sadd.s32 %s120, 1
    %p124 = scmp.eq.s32.totalorder %s11, 1
    %p125 = scmp.ne.s32.totalorder %s120, %s122
    %p126 = scmp.eq.s32.totalorder %s11, 0
    %p127 = por %p125, %p126
    %p128 = scmp.ne.s32.totalorder %s120, %s122
    %p129 = scmp.eq.s32.totalorder %s16, 1
    %p130 = por %p128, %p129
    %p131 = scmp.ne.s32.totalorder %s122, %s123
    %p132 = scmp.eq.s32.totalorder %s16, 0
    %p133 = por %p131, %p132
    %p134 = scmp.ne.s32.totalorder %s122, %s123
    %p135 = scmp.eq.s32.totalorder %s17, 1
    %p136 = por %p134, %p135
    %p138 = scmp.ne.s32.totalorder %s123, %s137
    %p139 = scmp.eq.s32.totalorder %s17, 0
    %p140 = por %p138, %p139
    %s141 = ssub.s32 %s19, %s26
    %p142 = scmp.eq.s32.totalorder %s141, 0
    %s144 = sadd.s32 %s143, 1
    %s145 = scalar_select %p142, %s143, %s144
    %p148 = pneg %p142
    %p149 = scmp.eq.s32.totalorder %s11, 1
    %p150 = por %p148, %p149
    %p151 = scmp.ne.s32.totalorder %s143, %s146
    %p152 = scmp.eq.s32.totalorder %s11, 0
    %p153 = por %p151, %p152
    %p154 = scmp.ne.s32.totalorder %s143, %s146
    %p155 = scmp.eq.s32.totalorder %s16, 1
    %p156 = por %p154, %p155
    %p157 = scmp.ne.s32.totalorder %s146, %s147
    %p158 = scmp.eq.s32.totalorder %s16, 0
    %p159 = por %p157, %p158
    %p160 = scmp.ne.s32.totalorder %s146, %s147
    %p161 = scmp.eq.s32.totalorder %s17, 1
    %p162 = por %p160, %p161
    %p164 = scmp.ne.s32.totalorder %s147, %s163
    %p165 = scmp.eq.s32.totalorder %s17, 0
    %p166 = por %p164, %p165
    %p167 = scmp.le.s32.totalorder 1, %s11
    %p168 = scmp.lt.s32.totalorder %s11, 3
    %p169 = pnand %p167, %p168
    %p170 = pneg %p169
    // Predicated region
    $region9: #{tpu_custom_call.1} parent=5 // pred_check
      _
    $region10: #{tpu_custom_call.1} parent=5 // pred_check_branch
      %172 = sbr.rel (%p169) target = $region12
    $region11: #{tpu_custom_call.1} parent=5 // pred_region
      %s173 = ssub.s32 %s11, 1
      // Predicated region
      $region13: #{tpu_custom_call.1} parent=11 // pred_check
        %p174 = pneg %p49
      $region14: #{tpu_custom_call.1} parent=11 // pred_check_branch
        %176 = sbr.rel (%p174) target = $region16
      $region15: #{tpu_custom_call.1} parent=11 // pred_region
        %s177 = smul.u32 64, %s21
        %p178 = scmp.lt.s32.totalorder %s177, 63
        %s179 = scalar_select %p178, %s177, 63
        %s180 = smul.addr %s179, 4
        %s181 = scalar_lea.vmem %s0, %s180
        %s182 = smul.u32 64, %s21
      $region16: #{tpu_custom_call.1} parent=11 // pred_fallthru
        _
      // Predicated region
      $region17: #{tpu_custom_call.1} parent=11 // pred_check
        %p183 = pneg %p70
      $region18: #{tpu_custom_call.1} parent=11 // pred_check_branch
        %185 = sbr.rel (%p183) target = $region20
      $region19: #{tpu_custom_call.1} parent=11 // pred_region
        _
      $region20: #{tpu_custom_call.1} parent=11 // pred_fallthru
        _
      // Predicated region
      $region21: #{tpu_custom_call.1} parent=11 // pred_check
        %p186 = pneg %p91
      $region22: #{tpu_custom_call.1} parent=11 // pred_check_branch
        %188 = sbr.rel (%p186) target = $region24
      $region23: #{tpu_custom_call.1} parent=11 // pred_region
        _
      $region24: #{tpu_custom_call.1} parent=11 // pred_fallthru
        _
      // Predicated region
      $region25: #{tpu_custom_call.1} parent=11 // pred_check
        %p189 = pneg %p112
      $region26: #{tpu_custom_call.1} parent=11 // pred_check_branch
        %191 = sbr.rel (%p189) target = $region28
      $region27: #{tpu_custom_call.1} parent=11 // pred_region
        _
      $region28: #{tpu_custom_call.1} parent=11 // pred_fallthru
        _
      // Predicated region
      $region29: #{tpu_custom_call.1} parent=11 // pred_check
        %p192 = pneg %p133
      $region30: #{tpu_custom_call.1} parent=11 // pred_check_branch
        %194 = sbr.rel (%p192) target = $region32
      $region31: #{tpu_custom_call.1} parent=11 // pred_region
        _
      $region32: #{tpu_custom_call.1} parent=11 // pred_fallthru
        _
    $region12: #{tpu_custom_call.1} parent=5 // pred_fallthru
      _
    %p195 = scmp.lt.s32.totalorder %s11, 2
    // Predicated region
    $region33: #{tpu_custom_call.1} parent=5 // pred_check
      %p196 = pneg %p195
    $region34: #{tpu_custom_call.1} parent=5 // pred_check_branch
      %198 = sbr.rel (%p196) target = $region36
    $region35: #{tpu_custom_call.1} parent=5 // pred_region
      _
    $region36: #{tpu_custom_call.1} parent=5 // pred_fallthru
      _
    %p199 = scmp.le.s32.totalorder 1, %s11
    %p200 = scmp.lt.s32.totalorder %s11, 3
    %p201 = pnand %p199, %p200
    %p202 = pneg %p201
    // Predicated region
    $region37: #{tpu_custom_call.1} parent=5 // pred_check
      _
    $region38: #{tpu_custom_call.1} parent=5 // pred_check_branch
      %204 = sbr.rel (%p201) target = $region40
    $region39: #{tpu_custom_call.1} parent=5 // pred_region
      %s205 = ssub.s32 %s11, 1
      %s206 = smul.u32 64, %s21
      %p207 = scmp.lt.s32.totalorder %s206, 63
      %s208 = scalar_select %p207, %s206, 63
      %s209 = smul.addr %s208, 4
      %s210 = scalar_lea.vmem %s0, %s209
      %p211 = pneg %p49
      %p212 = pneg %p46
      %p213 = pneg %p70
      %p214 = pneg %p67
      %p215 = pneg %p91
      %p216 = pneg %p88
      %p217 = pneg %p112
      %p218 = pneg %p109
      %p219 = pneg %p133
      %p220 = pneg %p130
      %p221 = pneg %p159
      %p222 = pneg %p156
      %s223 = smul.u32 64, %s21
      %p224 = scmp.lt.s32.totalorder %s223, 63
      %s225 = scalar_select %p224, %s223, 63
      %s226 = smul.addr %s225, 4
      %s227 = scalar_lea.vmem %s5, %s226
      %s228 = smul.u32 64, %s21
      %p229 = scmp.lt.s32.totalorder %s228, 63
      %s230 = scalar_select %p229, %s228, 63
      %s231 = smul.addr %s230, 4
      %s232 = scalar_lea.vmem %s0, %s231
      %s233 = smul.u32 64, %s21
      %s234 = smul.u32 64, %s21
      %p235 = scmp.lt.s32.totalorder %s234, 63
      %s236 = scalar_select %p235, %s234, 63
      %s237 = smul.addr %s236, 4
      %s238 = scalar_lea.vmem %s5, %s237
      %s239 = smul.u32 64, %s21
      %p241 = scmp.eq.s32.totalorder %s20, 0
      %p242 = scmp.eq.s32.totalorder %s21, 0
      %p243 = pnand %p241, %p242
      %p244 = pneg %p243
      // Predicated region
      $region41: #{tpu_custom_call.1} parent=39 // pred_check
        _
      $region42: #{tpu_custom_call.1} parent=39 // pred_check_branch
        %246 = sbr.rel (%p243) target = $region44
      $region43: #{tpu_custom_call.1} parent=39 // pred_region
        %vm247 = vcmask 237568
        %248 = vst.msk [vmem:[#allocation2] sm:$0x1] %vm247, 0.0
        %249 = vst.msk [vmem:[#allocation3] sm:$0x1] %vm247, 0.0
      $region44: #{tpu_custom_call.1} parent=39 // pred_fallthru
        _
      %v250 = vld [vmem:[%s232] sm:$0xf]
      %v251 = vld [vmem:[%s232 + $0x4] sm:$0xf]
      %v252 = vld [vmem:[%s232 + $0x8] sm:$0xf]
      %v253 = vld [vmem:[%s232 + $0xc] sm:$0xf]
      %v254 = vld [vmem:[%s232 + $0x10] sm:$0xf]
      %v255 = vld [vmem:[%s232 + $0x14] sm:$0xf]
      %v256 = vld [vmem:[%s232 + $0x18] sm:$0xf]
      %v257 = vld [vmem:[%s232 + $0x1c] sm:$0xf]
      %v258 = vld [vmem:[%s232 + $0x20] sm:$0xf]
      %v259 = vld [vmem:[%s232 + $0x24] sm:$0xf]
      %v260 = vld [vmem:[%s232 + $0x28] sm:$0xf]
      %v261 = vld [vmem:[%s232 + $0x2c] sm:$0xf]
      %v262 = vld [vmem:[%s232 + $0x30] sm:$0xf]
      %v263 = vld [vmem:[%s232 + $0x34] sm:$0xf]
      %v264 = vld [vmem:[%s232 + $0x38] sm:$0xf]
      %v265 = vld [vmem:[%s232 + $0x3c] sm:$0xf]
      %v266 = vld [vmem:[%s232 + $0x40] sm:$0xf]
      %v267 = vld [vmem:[%s232 + $0x44] sm:$0xf]
      %v268 = vld [vmem:[%s232 + $0x48] sm:$0xf]
      %v269 = vld [vmem:[%s232 + $0x4c] sm:$0xf]
      %v270 = vld [vmem:[%s232 + $0x50] sm:$0xf]
      %v271 = vld [vmem:[%s232 + $0x54] sm:$0xf]
      %v272 = vld [vmem:[%s232 + $0x58] sm:$0xf]
      %v273 = vld [vmem:[%s232 + $0x5c] sm:$0xf]
      %v274 = vld [vmem:[%s232 + $0x60] sm:$0xf]
      %v275 = vld [vmem:[%s232 + $0x64] sm:$0xf]
      %v276 = vld [vmem:[%s232 + $0x68] sm:$0xf]
      %v277 = vld [vmem:[%s232 + $0x6c] sm:$0xf]
      %v278 = vld [vmem:[%s232 + $0x70] sm:$0xf]
      %v279 = vld [vmem:[%s232 + $0x74] sm:$0xf]
      %v280 = vld [vmem:[%s232 + $0x78] sm:$0xf]
      %v281 = vld [vmem:[%s232 + $0x7c] sm:$0xf]
      %v282 = vld [vmem:[%s232 + $0x80] sm:$0xf]
      %v283 = vld [vmem:[%s232 + $0x84] sm:$0xf]
      %v284 = vld [vmem:[%s232 + $0x88] sm:$0xf]
      %v285 = vld [vmem:[%s232 + $0x8c] sm:$0xf]
      %v286 = vld [vmem:[%s232 + $0x90] sm:$0xf]
      %v287 = vld [vmem:[%s232 + $0x94] sm:$0xf]
      %v288 = vld [vmem:[%s232 + $0x98] sm:$0xf]
      %v289 = vld [vmem:[%s232 + $0x9c] sm:$0xf]
      %v290 = vld [vmem:[%s232 + $0xa0] sm:$0xf]
      %v291 = vld [vmem:[%s232 + $0xa4] sm:$0xf]
      %v292 = vld [vmem:[%s232 + $0xa8] sm:$0xf]
      %v293 = vld [vmem:[%s232 + $0xac] sm:$0xf]
      %v294 = vld [vmem:[%s232 + $0xb0] sm:$0xf]
      %v295 = vld [vmem:[%s232 + $0xb4] sm:$0xf]
      %v296 = vld [vmem:[%s232 + $0xb8] sm:$0xf]
      %v297 = vld [vmem:[%s232 + $0xbc] sm:$0xf]
      %v298 = vld [vmem:[%s232 + $0xc0] sm:$0xf]
      %v299 = vld [vmem:[%s232 + $0xc4] sm:$0xf]
      %v300 = vld [vmem:[%s232 + $0xc8] sm:$0xf]
      %v301 = vld [vmem:[%s232 + $0xcc] sm:$0xf]
      %v302 = vld [vmem:[%s232 + $0xd0] sm:$0xf]
      %v303 = vld [vmem:[%s232 + $0xd4] sm:$0xf]
      %v304 = vld [vmem:[%s232 + $0xd8] sm:$0xf]
      %v305 = vld [vmem:[%s232 + $0xdc] sm:$0xf]
      %v306 = vld [vmem:[%s232 + $0xe0] sm:$0xf]
      %v307 = vld [vmem:[%s232 + $0xe4] sm:$0xf]
      %v308 = vld [vmem:[%s232 + $0xe8] sm:$0xf]
      %v309 = vld [vmem:[%s232 + $0xec] sm:$0xf]
      %v310 = vld [vmem:[%s232 + $0xf0] sm:$0xf]
      %v311 = vld [vmem:[%s232 + $0xf4] sm:$0xf]
      %v312 = vld [vmem:[%s232 + $0xf8] sm:$0xf]
      %v313 = vld [vmem:[%s232 + $0xfc] sm:$0xf]
      %v314 = vld [vmem:[%s1] sm:$0xf]
      %v315 = vld [vmem:[%s1 + $0x4] sm:$0xf]
      %v380 = vunpack.c.l.b16 %v250
      %v381 = vunpack.c.l.b16 %v251
      %v382 = vunpack.c.l.b16 %v252
      %v383 = vunpack.c.l.b16 %v253
      %v384 = vunpack.c.l.b16 %v254
      %v385 = vunpack.c.l.b16 %v255
      %v386 = vunpack.c.l.b16 %v256
      %v387 = vunpack.c.l.b16 %v257
      %v388 = vunpack.c.l.b16 %v258
      %v389 = vunpack.c.l.b16 %v259
      %v390 = vunpack.c.l.b16 %v260
      %v391 = vunpack.c.l.b16 %v261
      %v392 = vunpack.c.l.b16 %v262
      %v393 = vunpack.c.l.b16 %v263
      %v394 = vunpack.c.l.b16 %v264
      %v395 = vunpack.c.l.b16 %v265
      %v396 = vunpack.c.l.b16 %v266
      %v397 = vunpack.c.l.b16 %v267
      %v398 = vunpack.c.l.b16 %v268
      %v399 = vunpack.c.l.b16 %v269
      %v400 = vunpack.c.l.b16 %v270
      %v401 = vunpack.c.l.b16 %v271
      %v402 = vunpack.c.l.b16 %v272
      %v403 = vunpack.c.l.b16 %v273
      %v404 = vunpack.c.l.b16 %v274
      %v405 = vunpack.c.l.b16 %v275
      %v406 = vunpack.c.l.b16 %v276
      %v407 = vunpack.c.l.b16 %v277
      %v408 = vunpack.c.l.b16 %v278
      %v409 = vunpack.c.l.b16 %v279
      %v410 = vunpack.c.l.b16 %v280
      %v411 = vunpack.c.l.b16 %v281
      %v412 = vunpack.c.l.b16 %v282
      %v413 = vunpack.c.l.b16 %v283
      %v414 = vunpack.c.l.b16 %v284
      %v415 = vunpack.c.l.b16 %v285
      %v416 = vunpack.c.l.b16 %v286
      %v417 = vunpack.c.l.b16 %v287
      %v418 = vunpack.c.l.b16 %v288
      %v419 = vunpack.c.l.b16 %v289
      %v420 = vunpack.c.l.b16 %v290
      %v421 = vunpack.c.l.b16 %v291
      %v422 = vunpack.c.l.b16 %v292
      %v423 = vunpack.c.l.b16 %v293
      %v424 = vunpack.c.l.b16 %v294
      %v425 = vunpack.c.l.b16 %v295
      %v426 = vunpack.c.l.b16 %v296
      %v427 = vunpack.c.l.b16 %v297
      %v428 = vunpack.c.l.b16 %v298
      %v429 = vunpack.c.l.b16 %v299
      %v430 = vunpack.c.l.b16 %v300
      %v431 = vunpack.c.l.b16 %v301
      %v432 = vunpack.c.l.b16 %v302
      %v433 = vunpack.c.l.b16 %v303
      %v434 = vunpack.c.l.b16 %v304
      %v435 = vunpack.c.l.b16 %v305
      %v436 = vunpack.c.l.b16 %v306
      %v437 = vunpack.c.l.b16 %v307
      %v438 = vunpack.c.l.b16 %v308
      %v439 = vunpack.c.l.b16 %v309
      %v440 = vunpack.c.l.b16 %v310
      %v441 = vunpack.c.l.b16 %v311
      %v442 = vunpack.c.l.b16 %v312
      %v443 = vunpack.c.l.b16 %v313
      %v444 = vpack.c.b16 %v381, %v380
      %v445 = vpack.c.b16 %v383, %v382
      %v446 = vpack.c.b16 %v385, %v384
      %v447 = vpack.c.b16 %v387, %v386
      %v448 = vpack.c.b16 %v389, %v388
      %v449 = vpack.c.b16 %v391, %v390
      %v450 = vpack.c.b16 %v393, %v392
      %v451 = vpack.c.b16 %v395, %v394
      %v452 = vpack.c.b16 %v397, %v396
      %v453 = vpack.c.b16 %v399, %v398
      %v454 = vpack.c.b16 %v401, %v400
      %v455 = vpack.c.b16 %v403, %v402
      %v456 = vpack.c.b16 %v405, %v404
      %v457 = vpack.c.b16 %v407, %v406
      %v458 = vpack.c.b16 %v409, %v408
      %v459 = vpack.c.b16 %v411, %v410
      %v460 = vpack.c.b16 %v413, %v412
      %v461 = vpack.c.b16 %v415, %v414
      %v462 = vpack.c.b16 %v417, %v416
      %v463 = vpack.c.b16 %v419, %v418
      %v464 = vpack.c.b16 %v421, %v420
      %v465 = vpack.c.b16 %v423, %v422
      %v466 = vpack.c.b16 %v425, %v424
      %v467 = vpack.c.b16 %v427, %v426
      %v468 = vpack.c.b16 %v429, %v428
      %v469 = vpack.c.b16 %v431, %v430
      %v470 = vpack.c.b16 %v433, %v432
      %v471 = vpack.c.b16 %v435, %v434
      %v472 = vpack.c.b16 %v437, %v436
      %v473 = vpack.c.b16 %v439, %v438
      %v474 = vpack.c.b16 %v441, %v440
      %v475 = vpack.c.b16 %v443, %v442
      %v478 = vunpack.c.l.b16 %v314
      %v479 = vunpack.c.l.b16 %v315
      %v480 = vpack.c.b16 %v479, %v478
      %vm482 = vcmask 130048
      %v484 = vsel %vm482, %v444, 0
      %v487 = vsel %vm482, %v445, 0
      %v490 = vsel %vm482, %v446, 0
      %v493 = vsel %vm482, %v447, 0
      %v496 = vsel %vm482, %v448, 0
      %v499 = vsel %vm482, %v449, 0
      %v502 = vsel %vm482, %v450, 0
      %v505 = vsel %vm482, %v451, 0
      %v508 = vsel %vm482, %v452, 0
      %v511 = vsel %vm482, %v453, 0
      %v514 = vsel %vm482, %v454, 0
      %v517 = vsel %vm482, %v455, 0
      %v520 = vsel %vm482, %v456, 0
      %v523 = vsel %vm482, %v457, 0
      %v526 = vsel %vm482, %v458, 0
      %v529 = vsel %vm482, %v459, 0
      %v532 = vsel %vm482, %v460, 0
      %v535 = vsel %vm482, %v461, 0
      %v538 = vsel %vm482, %v462, 0
      %v541 = vsel %vm482, %v463, 0
      %v544 = vsel %vm482, %v464, 0
      %v547 = vsel %vm482, %v465, 0
      %v550 = vsel %vm482, %v466, 0
      %v553 = vsel %vm482, %v467, 0
      %v556 = vsel %vm482, %v468, 0
      %v559 = vsel %vm482, %v469, 0
      %v562 = vsel %vm482, %v470, 0
      %v565 = vsel %vm482, %v471, 0
      %v568 = vsel %vm482, %v472, 0
      %v571 = vsel %vm482, %v473, 0
      %v574 = vsel %vm482, %v474, 0
      %v577 = vsel %vm482, %v475, 0
      %579 = vmatpush.bf16.msra.mxu0 0
      %580 = vmatpush.bf16.msra.mxu0 0
      %581 = vmatpush.bf16.msra.mxu0 0
      %582 = vmatpush.bf16.msra.mxu0 0
      %583 = vmatpush.bf16.msra.mxu0 0
      %584 = vmatpush.bf16.msra.mxu0 0
      %585 = vmatpush.bf16.msra.mxu0 0
      %586 = vmatpush.bf16.msra.mxu0 %v480
      %587 = vmatmul.bf16.gmra.mxu0 %v484
      %v588 = vpop.f32.mrf.mxu0
      %v589 = vadd.f32 0.0, %v588
      %v590 = vpop.f32.mrf.mxu0
      %v591 = vadd.f32 0.0, %v590
      %592 = vmatmul.bf16.gmra.mxu0 %v487
      %v593 = vpop.f32.mrf.mxu0
      %v594 = vadd.f32 0.0, %v593
      %v595 = vpop.f32.mrf.mxu0
      %v596 = vadd.f32 0.0, %v595
      %597 = vmatmul.bf16.gmra.mxu0 %v490
      %v598 = vpop.f32.mrf.mxu0
      %v599 = vadd.f32 0.0, %v598
      %v600 = vpop.f32.mrf.mxu0
      %v601 = vadd.f32 0.0, %v600
      %602 = vmatmul.bf16.gmra.mxu0 %v493
      %v603 = vpop.f32.mrf.mxu0
      %v604 = vadd.f32 0.0, %v603
      %v605 = vpop.f32.mrf.mxu0
      %v606 = vadd.f32 0.0, %v605
      %607 = vmatmul.bf16.gmra.mxu0 %v496
      %v608 = vpop.f32.mrf.mxu0
      %v609 = vadd.f32 0.0, %v608
      %v610 = vpop.f32.mrf.mxu0
      %v611 = vadd.f32 0.0, %v610
      %612 = vmatmul.bf16.gmra.mxu0 %v499
      %v613 = vpop.f32.mrf.mxu0
      %v614 = vadd.f32 0.0, %v613
      %v615 = vpop.f32.mrf.mxu0
      %v616 = vadd.f32 0.0, %v615
      %617 = vmatmul.bf16.gmra.mxu0 %v502
      %v618 = vpop.f32.mrf.mxu0
      %v619 = vadd.f32 0.0, %v618
      %v620 = vpop.f32.mrf.mxu0
      %v621 = vadd.f32 0.0, %v620
      %622 = vmatmul.bf16.gmra.mxu0 %v505
      %v623 = vpop.f32.mrf.mxu0
      %v624 = vadd.f32 0.0, %v623
      %v625 = vpop.f32.mrf.mxu0
      %v626 = vadd.f32 0.0, %v625
      %627 = vmatmul.bf16.gmra.mxu0 %v508
      %v628 = vpop.f32.mrf.mxu0
      %v629 = vadd.f32 0.0, %v628
      %v630 = vpop.f32.mrf.mxu0
      %v631 = vadd.f32 0.0, %v630
      %632 = vmatmul.bf16.gmra.mxu0 %v511
      %v633 = vpop.f32.mrf.mxu0
      %v634 = vadd.f32 0.0, %v633
      %v635 = vpop.f32.mrf.mxu0
      %v636 = vadd.f32 0.0, %v635
      %637 = vmatmul.bf16.gmra.mxu0 %v514
      %v638 = vpop.f32.mrf.mxu0
      %v639 = vadd.f32 0.0, %v638
      %v640 = vpop.f32.mrf.mxu0
      %v641 = vadd.f32 0.0, %v640
      %642 = vmatmul.bf16.gmra.mxu0 %v517
      %v643 = vpop.f32.mrf.mxu0
      %v644 = vadd.f32 0.0, %v643
      %v645 = vpop.f32.mrf.mxu0
      %v646 = vadd.f32 0.0, %v645
      %647 = vmatmul.bf16.gmra.mxu0 %v520
      %v648 = vpop.f32.mrf.mxu0
      %v649 = vadd.f32 0.0, %v648
      %v650 = vpop.f32.mrf.mxu0
      %v651 = vadd.f32 0.0, %v650
      %652 = vmatmul.bf16.gmra.mxu0 %v523
      %v653 = vpop.f32.mrf.mxu0
      %v654 = vadd.f32 0.0, %v653
      %v655 = vpop.f32.mrf.mxu0
      %v656 = vadd.f32 0.0, %v655
      %657 = vmatmul.bf16.gmra.mxu0 %v526
      %v658 = vpop.f32.mrf.mxu0
      %v659 = vadd.f32 0.0, %v658
      %v660 = vpop.f32.mrf.mxu0
      %v661 = vadd.f32 0.0, %v660
      %662 = vmatmul.bf16.gmra.mxu0 %v529
      %v663 = vpop.f32.mrf.mxu0
      %v664 = vadd.f32 0.0, %v663
      %v665 = vpop.f32.mrf.mxu0
      %v666 = vadd.f32 0.0, %v665
      %667 = vmatmul.bf16.gmra.mxu0 %v532
      %v668 = vpop.f32.mrf.mxu0
      %v669 = vadd.f32 0.0, %v668
      %v670 = vpop.f32.mrf.mxu0
      %v671 = vadd.f32 0.0, %v670
      %672 = vmatmul.bf16.gmra.mxu0 %v535
      %v673 = vpop.f32.mrf.mxu0
      %v674 = vadd.f32 0.0, %v673
      %v675 = vpop.f32.mrf.mxu0
      %v676 = vadd.f32 0.0, %v675
      %677 = vmatmul.bf16.gmra.mxu0 %v538
      %v678 = vpop.f32.mrf.mxu0
      %v679 = vadd.f32 0.0, %v678
      %v680 = vpop.f32.mrf.mxu0
      %v681 = vadd.f32 0.0, %v680
      %682 = vmatmul.bf16.gmra.mxu0 %v541
      %v683 = vpop.f32.mrf.mxu0
      %v684 = vadd.f32 0.0, %v683
      %v685 = vpop.f32.mrf.mxu0
      %v686 = vadd.f32 0.0, %v685
      %687 = vmatmul.bf16.gmra.mxu0 %v544
      %v688 = vpop.f32.mrf.mxu0
      %v689 = vadd.f32 0.0, %v688
      %v690 = vpop.f32.mrf.mxu0
      %v691 = vadd.f32 0.0, %v690
      %692 = vmatmul.bf16.gmra.mxu0 %v547
      %v693 = vpop.f32.mrf.mxu0
      %v694 = vadd.f32 0.0, %v693
      %v695 = vpop.f32.mrf.mxu0
      %v696 = vadd.f32 0.0, %v695
      %697 = vmatmul.bf16.gmra.mxu0 %v550
      %v698 = vpop.f32.mrf.mxu0
      %v699 = vadd.f32 0.0, %v698
      %v700 = vpop.f32.mrf.mxu0
      %v701 = vadd.f32 0.0, %v700
      %702 = vmatmul.bf16.gmra.mxu0 %v553
      %v703 = vpop.f32.mrf.mxu0
      %v704 = vadd.f32 0.0, %v703
      %v705 = vpop.f32.mrf.mxu0
      %v706 = vadd.f32 0.0, %v705
      %707 = vmatmul.bf16.gmra.mxu0 %v556
      %v708 = vpop.f32.mrf.mxu0
      %v709 = vadd.f32 0.0, %v708
      %v710 = vpop.f32.mrf.mxu0
      %v711 = vadd.f32 0.0, %v710
      %712 = vmatmul.bf16.gmra.mxu0 %v559
      %v713 = vpop.f32.mrf.mxu0
      %v714 = vadd.f32 0.0, %v713
      %v715 = vpop.f32.mrf.mxu0
      %v716 = vadd.f32 0.0, %v715
      %717 = vmatmul.bf16.gmra.mxu0 %v562
      %v718 = vpop.f32.mrf.mxu0
      %v719 = vadd.f32 0.0, %v718
      %v720 = vpop.f32.mrf.mxu0
      %v721 = vadd.f32 0.0, %v720
      %722 = vmatmul.bf16.gmra.mxu0 %v565
      %v723 = vpop.f32.mrf.mxu0
      %v724 = vadd.f32 0.0, %v723
      %v725 = vpop.f32.mrf.mxu0
      %v726 = vadd.f32 0.0, %v725
      %727 = vmatmul.bf16.gmra.mxu0 %v568
      %v728 = vpop.f32.mrf.mxu0
      %v729 = vadd.f32 0.0, %v728
      %v730 = vpop.f32.mrf.mxu0
      %v731 = vadd.f32 0.0, %v730
      %732 = vmatmul.bf16.gmra.mxu0 %v571
      %v733 = vpop.f32.mrf.mxu0
      %v734 = vadd.f32 0.0, %v733
      %v735 = vpop.f32.mrf.mxu0
      %v736 = vadd.f32 0.0, %v735
      %737 = vmatmul.bf16.gmra.mxu0 %v574
      %v738 = vpop.f32.mrf.mxu0
      %v739 = vadd.f32 0.0, %v738
      %v740 = vpop.f32.mrf.mxu0
      %v741 = vadd.f32 0.0, %v740
      %742 = vmatmul.bf16.gmra.mxu0 %v577
      %v743 = vpop.f32.mrf.mxu0
      %v744 = vadd.f32 0.0, %v743
      %v745 = vpop.f32.mrf.mxu0
      %v746 = vadd.f32 0.0, %v745
      %747 = vdwg.mxu0
      // Predicated region
      $region45: #{tpu_custom_call.1} parent=39 // pred_check
        %p748 = pneg %p241
      $region46: #{tpu_custom_call.1} parent=39 // pred_check_branch
        %750 = sbr.rel (%p748) target = $region48
      $region47: #{tpu_custom_call.1} parent=39 // pred_region
        %v751 = vld [vmem:[#allocation2] sm:$0x1]
        %vm752 = vcmask 244736
        %v753 = vsel %vm752, %v589, 0.0
        %v754 = vsel %vm752, %v591, 0.0
        %v755 = vadd.f32 %v753, %v754
        %v756 = vsel %vm752, %v594, 0.0
        %v757 = vadd.f32 %v755, %v756
        %v758 = vsel %vm752, %v596, 0.0
        %v759 = vadd.f32 %v757, %v758
        %v760 = vsel %vm752, %v599, 0.0
        %v761 = vadd.f32 %v759, %v760
        %v762 = vsel %vm752, %v601, 0.0
        %v763 = vadd.f32 %v761, %v762
        %v764 = vsel %vm752, %v604, 0.0
        %v765 = vadd.f32 %v763, %v764
        %v766 = vsel %vm752, %v606, 0.0
        %v767 = vadd.f32 %v765, %v766
        %v768 = vsel %vm752, %v609, 0.0
        %v769 = vadd.f32 %v767, %v768
        %v770 = vsel %vm752, %v611, 0.0
        %v771 = vadd.f32 %v769, %v770
        %v772 = vsel %vm752, %v614, 0.0
        %v773 = vadd.f32 %v771, %v772
        %v774 = vsel %vm752, %v616, 0.0
        %v775 = vadd.f32 %v773, %v774
        %v776 = vsel %vm752, %v619, 0.0
        %v777 = vadd.f32 %v775, %v776
        %v778 = vsel %vm752, %v621, 0.0
        %v779 = vadd.f32 %v777, %v778
        %v780 = vsel %vm752, %v624, 0.0
        %v781 = vadd.f32 %v779, %v780
        %v782 = vsel %vm752, %v626, 0.0
        %v783 = vadd.f32 %v781, %v782
        %v784 = vsel %vm752, %v629, 0.0
        %v785 = vadd.f32 %v783, %v784
        %v786 = vsel %vm752, %v631, 0.0
        %v787 = vadd.f32 %v785, %v786
        %v788 = vsel %vm752, %v634, 0.0
        %v789 = vadd.f32 %v787, %v788
        %v790 = vsel %vm752, %v636, 0.0
        %v791 = vadd.f32 %v789, %v790
        %v792 = vsel %vm752, %v639, 0.0
        %v793 = vadd.f32 %v791, %v792
        %v794 = vsel %vm752, %v641, 0.0
        %v795 = vadd.f32 %v793, %v794
        %v796 = vsel %vm752, %v644, 0.0
        %v797 = vadd.f32 %v795, %v796
        %v798 = vsel %vm752, %v646, 0.0
        %v799 = vadd.f32 %v797, %v798
        %v800 = vsel %vm752, %v649, 0.0
        %v801 = vadd.f32 %v799, %v800
        %v802 = vsel %vm752, %v651, 0.0
        %v803 = vadd.f32 %v801, %v802
        %v804 = vsel %vm752, %v654, 0.0
        %v805 = vadd.f32 %v803, %v804
        %v806 = vsel %vm752, %v656, 0.0
        %v807 = vadd.f32 %v805, %v806
        %v808 = vsel %vm752, %v659, 0.0
        %v809 = vadd.f32 %v807, %v808
        %v810 = vsel %vm752, %v661, 0.0
        %v811 = vadd.f32 %v809, %v810
        %v812 = vsel %vm752, %v664, 0.0
        %v813 = vadd.f32 %v811, %v812
        %v814 = vsel %vm752, %v666, 0.0
        %v815 = vadd.f32 %v813, %v814
        %v816 = vsel %vm752, %v669, 0.0
        %v817 = vadd.f32 %v815, %v816
        %v818 = vsel %vm752, %v671, 0.0
        %v819 = vadd.f32 %v817, %v818
        %v820 = vsel %vm752, %v674, 0.0
        %v821 = vadd.f32 %v819, %v820
        %v822 = vsel %vm752, %v676, 0.0
        %v823 = vadd.f32 %v821, %v822
        %v824 = vsel %vm752, %v679, 0.0
        %v825 = vadd.f32 %v823, %v824
        %v826 = vsel %vm752, %v681, 0.0
        %v827 = vadd.f32 %v825, %v826
        %v828 = vsel %vm752, %v684, 0.0
        %v829 = vadd.f32 %v827, %v828
        %v830 = vsel %vm752, %v686, 0.0
        %v831 = vadd.f32 %v829, %v830
        %v832 = vsel %vm752, %v689, 0.0
        %v833 = vadd.f32 %v831, %v832
        %v834 = vsel %vm752, %v691, 0.0
        %v835 = vadd.f32 %v833, %v834
        %v836 = vsel %vm752, %v694, 0.0
        %v837 = vadd.f32 %v835, %v836
        %v838 = vsel %vm752, %v696, 0.0
        %v839 = vadd.f32 %v837, %v838
        %v840 = vsel %vm752, %v699, 0.0
        %v841 = vadd.f32 %v839, %v840
        %v842 = vsel %vm752, %v701, 0.0
        %v843 = vadd.f32 %v841, %v842
        %v844 = vsel %vm752, %v704, 0.0
        %v845 = vadd.f32 %v843, %v844
        %v846 = vsel %vm752, %v706, 0.0
        %v847 = vadd.f32 %v845, %v846
        %v848 = vsel %vm752, %v709, 0.0
        %v849 = vadd.f32 %v847, %v848
        %v850 = vsel %vm752, %v711, 0.0
        %v851 = vadd.f32 %v849, %v850
        %v852 = vsel %vm752, %v714, 0.0
        %v853 = vadd.f32 %v851, %v852
        %v854 = vsel %vm752, %v716, 0.0
        %v855 = vadd.f32 %v853, %v854
        %v856 = vsel %vm752, %v719, 0.0
        %v857 = vadd.f32 %v855, %v856
        %v858 = vsel %vm752, %v721, 0.0
        %v859 = vadd.f32 %v857, %v858
        %v860 = vsel %vm752, %v724, 0.0
        %v861 = vadd.f32 %v859, %v860
        %v862 = vsel %vm752, %v726, 0.0
        %v863 = vadd.f32 %v861, %v862
        %v864 = vsel %vm752, %v729, 0.0
        %v865 = vadd.f32 %v863, %v864
        %v866 = vsel %vm752, %v731, 0.0
        %v867 = vadd.f32 %v865, %v866
        %v868 = vsel %vm752, %v734, 0.0
        %v869 = vadd.f32 %v867, %v868
        %v870 = vsel %vm752, %v736, 0.0
        %v871 = vadd.f32 %v869, %v870
        %v872 = vsel %vm752, %v739, 0.0
        %v873 = vadd.f32 %v871, %v872
        %v874 = vsel %vm752, %v741, 0.0
        %v875 = vadd.f32 %v873, %v874
        %v876 = vsel %vm752, %v744, 0.0
        %v877 = vadd.f32 %v875, %v876
        %v878 = vsel %vm752, %v746, 0.0
        %v879 = vadd.f32 %v877, %v878
        %v880 = vrot.slane %v879, 4
        %v881 = vadd.f32 %v879, %v880
        %v882 = vrot.slane %v881, 2
        %v883 = vadd.f32 %v881, %v882
        %v884 = vrot.slane %v883, 1
        %v885 = vadd.f32 %v883, %v884
        %v886 = vadd.f32 %v751, %v885
        %vm887 = vcmask 237568
        %888 = vst.msk [vmem:[#allocation2] sm:$0x1] %vm887, %v886
        %v889 = vld [vmem:[#allocation3] sm:$0x1]
        %v890 = vmul.f32 %v589, %v589
        %v891 = vmul.f32 %v591, %v591
        %v892 = vmul.f32 %v594, %v594
        %v893 = vmul.f32 %v596, %v596
        %v894 = vmul.f32 %v599, %v599
        %v895 = vmul.f32 %v601, %v601
        %v896 = vmul.f32 %v604, %v604
        %v897 = vmul.f32 %v606, %v606
        %v898 = vmul.f32 %v609, %v609
        %v899 = vmul.f32 %v611, %v611
        %v900 = vmul.f32 %v614, %v614
        %v901 = vmul.f32 %v616, %v616
        %v902 = vmul.f32 %v619, %v619
        %v903 = vmul.f32 %v621, %v621
        %v904 = vmul.f32 %v624, %v624
        %v905 = vmul.f32 %v626, %v626
        %v906 = vmul.f32 %v629, %v629
        %v907 = vmul.f32 %v631, %v631
        %v908 = vmul.f32 %v634, %v634
        %v909 = vmul.f32 %v636, %v636
        %v910 = vmul.f32 %v639, %v639
        %v911 = vmul.f32 %v641, %v641
        %v912 = vmul.f32 %v644, %v644
        %v913 = vmul.f32 %v646, %v646
        %v914 = vmul.f32 %v649, %v649
        %v915 = vmul.f32 %v651, %v651
        %v916 = vmul.f32 %v654, %v654
        %v917 = vmul.f32 %v656, %v656
        %v918 = vmul.f32 %v659, %v659
        %v919 = vmul.f32 %v661, %v661
        %v920 = vmul.f32 %v664, %v664
        %v921 = vmul.f32 %v666, %v666
        %v922 = vmul.f32 %v669, %v669
        %v923 = vmul.f32 %v671, %v671
        %v924 = vmul.f32 %v674, %v674
        %v925 = vmul.f32 %v676, %v676
        %v926 = vmul.f32 %v679, %v679
        %v927 = vmul.f32 %v681, %v681
        %v928 = vmul.f32 %v684, %v684
        %v929 = vmul.f32 %v686, %v686
        %v930 = vmul.f32 %v689, %v689
        %v931 = vmul.f32 %v691, %v691
        %v932 = vmul.f32 %v694, %v694
        %v933 = vmul.f32 %v696, %v696
        %v934 = vmul.f32 %v699, %v699
        %v935 = vmul.f32 %v701, %v701
        %v936 = vmul.f32 %v704, %v704
        %v937 = vmul.f32 %v706, %v706
        %v938 = vmul.f32 %v709, %v709
        %v939 = vmul.f32 %v711, %v711
        %v940 = vmul.f32 %v714, %v714
        %v941 = vmul.f32 %v716, %v716
        %v942 = vmul.f32 %v719, %v719
        %v943 = vmul.f32 %v721, %v721
        %v944 = vmul.f32 %v724, %v724
        %v945 = vmul.f32 %v726, %v726
        %v946 = vmul.f32 %v729, %v729
        %v947 = vmul.f32 %v731, %v731
        %v948 = vmul.f32 %v734, %v734
        %v949 = vmul.f32 %v736, %v736
        %v950 = vmul.f32 %v739, %v739
        %v951 = vmul.f32 %v741, %v741
        %v952 = vmul.f32 %v744, %v744
        %v953 = vmul.f32 %v746, %v746
        %v954 = vsel %vm752, %v890, 0.0
        %v955 = vsel %vm752, %v891, 0.0
        %v956 = vadd.f32 %v954, %v955
        %v957 = vsel %vm752, %v892, 0.0
        %v958 = vadd.f32 %v956, %v957
        %v959 = vsel %vm752, %v893, 0.0
        %v960 = vadd.f32 %v958, %v959
        %v961 = vsel %vm752, %v894, 0.0
        %v962 = vadd.f32 %v960, %v961
        %v963 = vsel %vm752, %v895, 0.0
        %v964 = vadd.f32 %v962, %v963
        %v965 = vsel %vm752, %v896, 0.0
        %v966 = vadd.f32 %v964, %v965
        %v967 = vsel %vm752, %v897, 0.0
        %v968 = vadd.f32 %v966, %v967
        %v969 = vsel %vm752, %v898, 0.0
        %v970 = vadd.f32 %v968, %v969
        %v971 = vsel %vm752, %v899, 0.0
        %v972 = vadd.f32 %v970, %v971
        %v973 = vsel %vm752, %v900, 0.0
        %v974 = vadd.f32 %v972, %v973
        %v975 = vsel %vm752, %v901, 0.0
        %v976 = vadd.f32 %v974, %v975
        %v977 = vsel %vm752, %v902, 0.0
        %v978 = vadd.f32 %v976, %v977
        %v979 = vsel %vm752, %v903, 0.0
        %v980 = vadd.f32 %v978, %v979
        %v981 = vsel %vm752, %v904, 0.0
        %v982 = vadd.f32 %v980, %v981
        %v983 = vsel %vm752, %v905, 0.0
        %v984 = vadd.f32 %v982, %v983
        %v985 = vsel %vm752, %v906, 0.0
        %v986 = vadd.f32 %v984, %v985
        %v987 = vsel %vm752, %v907, 0.0
        %v988 = vadd.f32 %v986, %v987
        %v989 = vsel %vm752, %v908, 0.0
        %v990 = vadd.f32 %v988, %v989
        %v991 = vsel %vm752, %v909, 0.0
        %v992 = vadd.f32 %v990, %v991
        %v993 = vsel %vm752, %v910, 0.0
        %v994 = vadd.f32 %v992, %v993
        %v995 = vsel %vm752, %v911, 0.0
        %v996 = vadd.f32 %v994, %v995
        %v997 = vsel %vm752, %v912, 0.0
        %v998 = vadd.f32 %v996, %v997
        %v999 = vsel %vm752, %v913, 0.0
        %v1000 = vadd.f32 %v998, %v999
        %v1001 = vsel %vm752, %v914, 0.0
        %v1002 = vadd.f32 %v1000, %v1001
        %v1003 = vsel %vm752, %v915, 0.0
        %v1004 = vadd.f32 %v1002, %v1003
        %v1005 = vsel %vm752, %v916, 0.0
        %v1006 = vadd.f32 %v1004, %v1005
        %v1007 = vsel %vm752, %v917, 0.0
        %v1008 = vadd.f32 %v1006, %v1007
        %v1009 = vsel %vm752, %v918, 0.0
        %v1010 = vadd.f32 %v1008, %v1009
        %v1011 = vsel %vm752, %v919, 0.0
        %v1012 = vadd.f32 %v1010, %v1011
        %v1013 = vsel %vm752, %v920, 0.0
        %v1014 = vadd.f32 %v1012, %v1013
        %v1015 = vsel %vm752, %v921, 0.0
        %v1016 = vadd.f32 %v1014, %v1015
        %v1017 = vsel %vm752, %v922, 0.0
        %v1018 = vadd.f32 %v1016, %v1017
        %v1019 = vsel %vm752, %v923, 0.0
        %v1020 = vadd.f32 %v1018, %v1019
        %v1021 = vsel %vm752, %v924, 0.0
        %v1022 = vadd.f32 %v1020, %v1021
        %v1023 = vsel %vm752, %v925, 0.0
        %v1024 = vadd.f32 %v1022, %v1023
        %v1025 = vsel %vm752, %v926, 0.0
        %v1026 = vadd.f32 %v1024, %v1025
        %v1027 = vsel %vm752, %v927, 0.0
        %v1028 = vadd.f32 %v1026, %v1027
        %v1029 = vsel %vm752, %v928, 0.0
        %v1030 = vadd.f32 %v1028, %v1029
        %v1031 = vsel %vm752, %v929, 0.0
        %v1032 = vadd.f32 %v1030, %v1031
        %v1033 = vsel %vm752, %v930, 0.0
        %v1034 = vadd.f32 %v1032, %v1033
        %v1035 = vsel %vm752, %v931, 0.0
        %v1036 = vadd.f32 %v1034, %v1035
        %v1037 = vsel %vm752, %v932, 0.0
        %v1038 = vadd.f32 %v1036, %v1037
        %v1039 = vsel %vm752, %v933, 0.0
        %v1040 = vadd.f32 %v1038, %v1039
        %v1041 = vsel %vm752, %v934, 0.0
        %v1042 = vadd.f32 %v1040, %v1041
        %v1043 = vsel %vm752, %v935, 0.0
        %v1044 = vadd.f32 %v1042, %v1043
        %v1045 = vsel %vm752, %v936, 0.0
        %v1046 = vadd.f32 %v1044, %v1045
        %v1047 = vsel %vm752, %v937, 0.0
        %v1048 = vadd.f32 %v1046, %v1047
        %v1049 = vsel %vm752, %v938, 0.0
        %v1050 = vadd.f32 %v1048, %v1049
        %v1051 = vsel %vm752, %v939, 0.0
        %v1052 = vadd.f32 %v1050, %v1051
        %v1053 = vsel %vm752, %v940, 0.0
        %v1054 = vadd.f32 %v1052, %v1053
        %v1055 = vsel %vm752, %v941, 0.0
        %v1056 = vadd.f32 %v1054, %v1055
        %v1057 = vsel %vm752, %v942, 0.0
        %v1058 = vadd.f32 %v1056, %v1057
        %v1059 = vsel %vm752, %v943, 0.0
        %v1060 = vadd.f32 %v1058, %v1059
        %v1061 = vsel %vm752, %v944, 0.0
        %v1062 = vadd.f32 %v1060, %v1061
        %v1063 = vsel %vm752, %v945, 0.0
        %v1064 = vadd.f32 %v1062, %v1063
        %v1065 = vsel %vm752, %v946, 0.0
        %v1066 = vadd.f32 %v1064, %v1065
        %v1067 = vsel %vm752, %v947, 0.0
        %v1068 = vadd.f32 %v1066, %v1067
        %v1069 = vsel %vm752, %v948, 0.0
        %v1070 = vadd.f32 %v1068, %v1069
        %v1071 = vsel %vm752, %v949, 0.0
        %v1072 = vadd.f32 %v1070, %v1071
        %v1073 = vsel %vm752, %v950, 0.0
        %v1074 = vadd.f32 %v1072, %v1073
        %v1075 = vsel %vm752, %v951, 0.0
        %v1076 = vadd.f32 %v1074, %v1075
        %v1077 = vsel %vm752, %v952, 0.0
        %v1078 = vadd.f32 %v1076, %v1077
        %v1079 = vsel %vm752, %v953, 0.0
        %v1080 = vadd.f32 %v1078, %v1079
        %v1081 = vrot.slane %v1080, 4
        %v1082 = vadd.f32 %v1080, %v1081
        %v1083 = vrot.slane %v1082, 2
        %v1084 = vadd.f32 %v1082, %v1083
        %v1085 = vrot.slane %v1084, 1
        %v1086 = vadd.f32 %v1084, %v1085
        %v1087 = vadd.f32 %v889, %v1086
        %1088 = vst.msk [vmem:[#allocation3] sm:$0x1] %vm887, %v1087
        %v1089 = vpack.c.bf16 %v589, %v589
        %v1090 = vpack.c.bf16 %v591, %v591
        %v1091 = vpack.c.bf16 %v594, %v594
        %v1092 = vpack.c.bf16 %v596, %v596
        %v1093 = vpack.c.bf16 %v599, %v599
        %v1094 = vpack.c.bf16 %v601, %v601
        %v1095 = vpack.c.bf16 %v604, %v604
        %v1096 = vpack.c.bf16 %v606, %v606
        %v1097 = vpack.c.bf16 %v609, %v609
        %v1098 = vpack.c.bf16 %v611, %v611
        %v1099 = vpack.c.bf16 %v614, %v614
        %v1100 = vpack.c.bf16 %v616, %v616
        %v1101 = vpack.c.bf16 %v619, %v619
        %v1102 = vpack.c.bf16 %v621, %v621
        %v1103 = vpack.c.bf16 %v624, %v624
        %v1104 = vpack.c.bf16 %v626, %v626
        %v1105 = vpack.c.bf16 %v629, %v629
        %v1106 = vpack.c.bf16 %v631, %v631
        %v1107 = vpack.c.bf16 %v634, %v634
        %v1108 = vpack.c.bf16 %v636, %v636
        %v1109 = vpack.c.bf16 %v639, %v639
        %v1110 = vpack.c.bf16 %v641, %v641
        %v1111 = vpack.c.bf16 %v644, %v644
        %v1112 = vpack.c.bf16 %v646, %v646
        %v1113 = vpack.c.bf16 %v649, %v649
        %v1114 = vpack.c.bf16 %v651, %v651
        %v1115 = vpack.c.bf16 %v654, %v654
        %v1116 = vpack.c.bf16 %v656, %v656
        %v1117 = vpack.c.bf16 %v659, %v659
        %v1118 = vpack.c.bf16 %v661, %v661
        %v1119 = vpack.c.bf16 %v664, %v664
        %v1120 = vpack.c.bf16 %v666, %v666
        %v1121 = vpack.c.bf16 %v669, %v669
        %v1122 = vpack.c.bf16 %v671, %v671
        %v1123 = vpack.c.bf16 %v674, %v674
        %v1124 = vpack.c.bf16 %v676, %v676
        %v1125 = vpack.c.bf16 %v679, %v679
        %v1126 = vpack.c.bf16 %v681, %v681
        %v1127 = vpack.c.bf16 %v684, %v684
        %v1128 = vpack.c.bf16 %v686, %v686
        %v1129 = vpack.c.bf16 %v689, %v689
        %v1130 = vpack.c.bf16 %v691, %v691
        %v1131 = vpack.c.bf16 %v694, %v694
        %v1132 = vpack.c.bf16 %v696, %v696
        %v1133 = vpack.c.bf16 %v699, %v699
        %v1134 = vpack.c.bf16 %v701, %v701
        %v1135 = vpack.c.bf16 %v704, %v704
        %v1136 = vpack.c.bf16 %v706, %v706
        %v1137 = vpack.c.bf16 %v709, %v709
        %v1138 = vpack.c.bf16 %v711, %v711
        %v1139 = vpack.c.bf16 %v714, %v714
        %v1140 = vpack.c.bf16 %v716, %v716
        %v1141 = vpack.c.bf16 %v719, %v719
        %v1142 = vpack.c.bf16 %v721, %v721
        %v1143 = vpack.c.bf16 %v724, %v724
        %v1144 = vpack.c.bf16 %v726, %v726
        %v1145 = vpack.c.bf16 %v729, %v729
        %v1146 = vpack.c.bf16 %v731, %v731
        %v1147 = vpack.c.bf16 %v734, %v734
        %v1148 = vpack.c.bf16 %v736, %v736
        %v1149 = vpack.c.bf16 %v739, %v739
        %v1150 = vpack.c.bf16 %v741, %v741
        %v1151 = vpack.c.bf16 %v744, %v744
        %v1152 = vpack.c.bf16 %v746, %v746
        %vm1153 = vcmask 240640
        %1154 = vst.msk [vmem:[%s238] sm:$0xf] %vm1153, %v1089
        %1155 = vst.msk [vmem:[%s238 + $0x4] sm:$0xf] %vm1153, %v1090
        %1156 = vst.msk [vmem:[%s238 + $0x8] sm:$0xf] %vm1153, %v1091
        %1157 = vst.msk [vmem:[%s238 + $0xc] sm:$0xf] %vm1153, %v1092
        %1158 = vst.msk [vmem:[%s238 + $0x10] sm:$0xf] %vm1153, %v1093
        %1159 = vst.msk [vmem:[%s238 + $0x14] sm:$0xf] %vm1153, %v1094
        %1160 = vst.msk [vmem:[%s238 + $0x18] sm:$0xf] %vm1153, %v1095
        %1161 = vst.msk [vmem:[%s238 + $0x1c] sm:$0xf] %vm1153, %v1096
        %1162 = vst.msk [vmem:[%s238 + $0x20] sm:$0xf] %vm1153, %v1097
        %1163 = vst.msk [vmem:[%s238 + $0x24] sm:$0xf] %vm1153, %v1098
        %1164 = vst.msk [vmem:[%s238 + $0x28] sm:$0xf] %vm1153, %v1099
        %1165 = vst.msk [vmem:[%s238 + $0x2c] sm:$0xf] %vm1153, %v1100
        %1166 = vst.msk [vmem:[%s238 + $0x30] sm:$0xf] %vm1153, %v1101
        %1167 = vst.msk [vmem:[%s238 + $0x34] sm:$0xf] %vm1153, %v1102
        %1168 = vst.msk [vmem:[%s238 + $0x38] sm:$0xf] %vm1153, %v1103
        %1169 = vst.msk [vmem:[%s238 + $0x3c] sm:$0xf] %vm1153, %v1104
        %1170 = vst.msk [vmem:[%s238 + $0x40] sm:$0xf] %vm1153, %v1105
        %1171 = vst.msk [vmem:[%s238 + $0x44] sm:$0xf] %vm1153, %v1106
        %1172 = vst.msk [vmem:[%s238 + $0x48] sm:$0xf] %vm1153, %v1107
        %1173 = vst.msk [vmem:[%s238 + $0x4c] sm:$0xf] %vm1153, %v1108
        %1174 = vst.msk [vmem:[%s238 + $0x50] sm:$0xf] %vm1153, %v1109
        %1175 = vst.msk [vmem:[%s238 + $0x54] sm:$0xf] %vm1153, %v1110
        %1176 = vst.msk [vmem:[%s238 + $0x58] sm:$0xf] %vm1153, %v1111
        %1177 = vst.msk [vmem:[%s238 + $0x5c] sm:$0xf] %vm1153, %v1112
        %1178 = vst.msk [vmem:[%s238 + $0x60] sm:$0xf] %vm1153, %v1113
        %1179 = vst.msk [vmem:[%s238 + $0x64] sm:$0xf] %vm1153, %v1114
        %1180 = vst.msk [vmem:[%s238 + $0x68] sm:$0xf] %vm1153, %v1115
        %1181 = vst.msk [vmem:[%s238 + $0x6c] sm:$0xf] %vm1153, %v1116
        %1182 = vst.msk [vmem:[%s238 + $0x70] sm:$0xf] %vm1153, %v1117
        %1183 = vst.msk [vmem:[%s238 + $0x74] sm:$0xf] %vm1153, %v1118
        %1184 = vst.msk [vmem:[%s238 + $0x78] sm:$0xf] %vm1153, %v1119
        %1185 = vst.msk [vmem:[%s238 + $0x7c] sm:$0xf] %vm1153, %v1120
        %1186 = vst.msk [vmem:[%s238 + $0x80] sm:$0xf] %vm1153, %v1121
        %1187 = vst.msk [vmem:[%s238 + $0x84] sm:$0xf] %vm1153, %v1122
        %1188 = vst.msk [vmem:[%s238 + $0x88] sm:$0xf] %vm1153, %v1123
        %1189 = vst.msk [vmem:[%s238 + $0x8c] sm:$0xf] %vm1153, %v1124
        %1190 = vst.msk [vmem:[%s238 + $0x90] sm:$0xf] %vm1153, %v1125
        %1191 = vst.msk [vmem:[%s238 + $0x94] sm:$0xf] %vm1153, %v1126
        %1192 = vst.msk [vmem:[%s238 + $0x98] sm:$0xf] %vm1153, %v1127
        %1193 = vst.msk [vmem:[%s238 + $0x9c] sm:$0xf] %vm1153, %v1128
        %1194 = vst.msk [vmem:[%s238 + $0xa0] sm:$0xf] %vm1153, %v1129
        %1195 = vst.msk [vmem:[%s238 + $0xa4] sm:$0xf] %vm1153, %v1130
        %1196 = vst.msk [vmem:[%s238 + $0xa8] sm:$0xf] %vm1153, %v1131
        %1197 = vst.msk [vmem:[%s238 + $0xac] sm:$0xf] %vm1153, %v1132
        %1198 = vst.msk [vmem:[%s238 + $0xb0] sm:$0xf] %vm1153, %v1133
        %1199 = vst.msk [vmem:[%s238 + $0xb4] sm:$0xf] %vm1153, %v1134
        %1200 = vst.msk [vmem:[%s238 + $0xb8] sm:$0xf] %vm1153, %v1135
        %1201 = vst.msk [vmem:[%s238 + $0xbc] sm:$0xf] %vm1153, %v1136
        %1202 = vst.msk [vmem:[%s238 + $0xc0] sm:$0xf] %vm1153, %v1137
        %1203 = vst.msk [vmem:[%s238 + $0xc4] sm:$0xf] %vm1153, %v1138
        %1204 = vst.msk [vmem:[%s238 + $0xc8] sm:$0xf] %vm1153, %v1139
        %1205 = vst.msk [vmem:[%s238 + $0xcc] sm:$0xf] %vm1153, %v1140
        %1206 = vst.msk [vmem:[%s238 + $0xd0] sm:$0xf] %vm1153, %v1141
        %1207 = vst.msk [vmem:[%s238 + $0xd4] sm:$0xf] %vm1153, %v1142
        %1208 = vst.msk [vmem:[%s238 + $0xd8] sm:$0xf] %vm1153, %v1143
        %1209 = vst.msk [vmem:[%s238 + $0xdc] sm:$0xf] %vm1153, %v1144
        %1210 = vst.msk [vmem:[%s238 + $0xe0] sm:$0xf] %vm1153, %v1145
        %1211 = vst.msk [vmem:[%s238 + $0xe4] sm:$0xf] %vm1153, %v1146
        %1212 = vst.msk [vmem:[%s238 + $0xe8] sm:$0xf] %vm1153, %v1147
        %1213 = vst.msk [vmem:[%s238 + $0xec] sm:$0xf] %vm1153, %v1148
        %1214 = vst.msk [vmem:[%s238 + $0xf0] sm:$0xf] %vm1153, %v1149
        %1215 = vst.msk [vmem:[%s238 + $0xf4] sm:$0xf] %vm1153, %v1150
        %1216 = vst.msk [vmem:[%s238 + $0xf8] sm:$0xf] %vm1153, %v1151
        %1217 = vst.msk [vmem:[%s238 + $0xfc] sm:$0xf] %vm1153, %v1152
      $region48: #{tpu_custom_call.1} parent=39 // pred_fallthru
        _
      %p1218 = scmp.eq.s32.totalorder %s20, 1
      // Predicated region
      $region49: #{tpu_custom_call.1} parent=39 // pred_check
        %p1219 = pneg %p1218
      $region50: #{tpu_custom_call.1} parent=39 // pred_check_branch
        %1221 = sbr.rel (%p1219) target = $region52
      $region51: #{tpu_custom_call.1} parent=39 // pred_region
        %v1222 = vld [vmem:[#allocation2] sm:$0x1]
        %v1223 = vmul.f32 %v1222, 0.001953125
        %v1224 = vld [vmem:[#allocation3] sm:$0x1]
        %v1225 = vmul.f32 %v1224, 0.001953125
        %v1226 = vmul.f32 %v1223, %v1223
        %v1227 = vsub.f32 %v1225, %v1226
        %v1228 = vmax.f32 %v1227, 0.0
        %v1229 = vld [vmem:[%s2] sm:$0x1]
        %v1230 = vadd.f32 %v1228, 1e-05
        %v1231 = vrsqrt.pop %v1230
        %v1232 = vmul.f32 %v1231, %v1230
        %v1233 = vmul.f32 %v1232, %v1231
        %v1234 = vmul.f32 0.5, %v1233
        %v1235 = vsub.f32 1.5, %v1234
        %v1236 = vmul.f32 %v1231, %v1235
        %vm1237 = vweird.f32 %v1230
        %vm1238 = vweird.f32 %v1231
        %vm1239 = vmor %vm1237, %vm1238
        %v1240 = vsel %vm1239, %v1231, %v1236
        %v1241 = vmul.f32 %v1229, %v1240
        %v1243 = vperm.slane %v1223, 0
        %v1245 = vsub.f32 %v589, %v1243
        %v1246 = vsub.f32 %v591, %v1243
        %v1247 = vsub.f32 %v594, %v1243
        %v1248 = vsub.f32 %v596, %v1243
        %v1249 = vsub.f32 %v599, %v1243
        %v1250 = vsub.f32 %v601, %v1243
        %v1251 = vsub.f32 %v604, %v1243
        %v1252 = vsub.f32 %v606, %v1243
        %v1253 = vsub.f32 %v609, %v1243
        %v1254 = vsub.f32 %v611, %v1243
        %v1255 = vsub.f32 %v614, %v1243
        %v1256 = vsub.f32 %v616, %v1243
        %v1257 = vsub.f32 %v619, %v1243
        %v1258 = vsub.f32 %v621, %v1243
        %v1259 = vsub.f32 %v624, %v1243
        %v1260 = vsub.f32 %v626, %v1243
        %v1261 = vsub.f32 %v629, %v1243
        %v1262 = vsub.f32 %v631, %v1243
        %v1263 = vsub.f32 %v634, %v1243
        %v1264 = vsub.f32 %v636, %v1243
        %v1265 = vsub.f32 %v639, %v1243
        %v1266 = vsub.f32 %v641, %v1243
        %v1267 = vsub.f32 %v644, %v1243
        %v1268 = vsub.f32 %v646, %v1243
        %v1269 = vsub.f32 %v649, %v1243
        %v1270 = vsub.f32 %v651, %v1243
        %v1271 = vsub.f32 %v654, %v1243
        %v1272 = vsub.f32 %v656, %v1243
        %v1273 = vsub.f32 %v659, %v1243
        %v1274 = vsub.f32 %v661, %v1243
        %v1275 = vsub.f32 %v664, %v1243
        %v1276 = vsub.f32 %v666, %v1243
        %v1277 = vsub.f32 %v669, %v1243
        %v1278 = vsub.f32 %v671, %v1243
        %v1279 = vsub.f32 %v674, %v1243
        %v1280 = vsub.f32 %v676, %v1243
        %v1281 = vsub.f32 %v679, %v1243
        %v1282 = vsub.f32 %v681, %v1243
        %v1283 = vsub.f32 %v684, %v1243
        %v1284 = vsub.f32 %v686, %v1243
        %v1285 = vsub.f32 %v689, %v1243
        %v1286 = vsub.f32 %v691, %v1243
        %v1287 = vsub.f32 %v694, %v1243
        %v1288 = vsub.f32 %v696, %v1243
        %v1289 = vsub.f32 %v699, %v1243
        %v1290 = vsub.f32 %v701, %v1243
        %v1291 = vsub.f32 %v704, %v1243
        %v1292 = vsub.f32 %v706, %v1243
        %v1293 = vsub.f32 %v709, %v1243
        %v1294 = vsub.f32 %v711, %v1243
        %v1295 = vsub.f32 %v714, %v1243
        %v1296 = vsub.f32 %v716, %v1243
        %v1297 = vsub.f32 %v719, %v1243
        %v1298 = vsub.f32 %v721, %v1243
        %v1299 = vsub.f32 %v724, %v1243
        %v1300 = vsub.f32 %v726, %v1243
        %v1301 = vsub.f32 %v729, %v1243
        %v1302 = vsub.f32 %v731, %v1243
        %v1303 = vsub.f32 %v734, %v1243
        %v1304 = vsub.f32 %v736, %v1243
        %v1305 = vsub.f32 %v739, %v1243
        %v1306 = vsub.f32 %v741, %v1243
        %v1307 = vsub.f32 %v744, %v1243
        %v1308 = vsub.f32 %v746, %v1243
        %v1310 = vperm.slane %v1241, 0
        %v1312 = vmul.f32 %v1245, %v1310
        %v1313 = vmul.f32 %v1246, %v1310
        %v1314 = vmul.f32 %v1247, %v1310
        %v1315 = vmul.f32 %v1248, %v1310
        %v1316 = vmul.f32 %v1249, %v1310
        %v1317 = vmul.f32 %v1250, %v1310
        %v1318 = vmul.f32 %v1251, %v1310
        %v1319 = vmul.f32 %v1252, %v1310
        %v1320 = vmul.f32 %v1253, %v1310
        %v1321 = vmul.f32 %v1254, %v1310
        %v1322 = vmul.f32 %v1255, %v1310
        %v1323 = vmul.f32 %v1256, %v1310
        %v1324 = vmul.f32 %v1257, %v1310
        %v1325 = vmul.f32 %v1258, %v1310
        %v1326 = vmul.f32 %v1259, %v1310
        %v1327 = vmul.f32 %v1260, %v1310
        %v1328 = vmul.f32 %v1261, %v1310
        %v1329 = vmul.f32 %v1262, %v1310
        %v1330 = vmul.f32 %v1263, %v1310
        %v1331 = vmul.f32 %v1264, %v1310
        %v1332 = vmul.f32 %v1265, %v1310
        %v1333 = vmul.f32 %v1266, %v1310
        %v1334 = vmul.f32 %v1267, %v1310
        %v1335 = vmul.f32 %v1268, %v1310
        %v1336 = vmul.f32 %v1269, %v1310
        %v1337 = vmul.f32 %v1270, %v1310
        %v1338 = vmul.f32 %v1271, %v1310
        %v1339 = vmul.f32 %v1272, %v1310
        %v1340 = vmul.f32 %v1273, %v1310
        %v1341 = vmul.f32 %v1274, %v1310
        %v1342 = vmul.f32 %v1275, %v1310
        %v1343 = vmul.f32 %v1276, %v1310
        %v1344 = vmul.f32 %v1277, %v1310
        %v1345 = vmul.f32 %v1278, %v1310
        %v1346 = vmul.f32 %v1279, %v1310
        %v1347 = vmul.f32 %v1280, %v1310
        %v1348 = vmul.f32 %v1281, %v1310
        %v1349 = vmul.f32 %v1282, %v1310
        %v1350 = vmul.f32 %v1283, %v1310
        %v1351 = vmul.f32 %v1284, %v1310
        %v1352 = vmul.f32 %v1285, %v1310
        %v1353 = vmul.f32 %v1286, %v1310
        %v1354 = vmul.f32 %v1287, %v1310
        %v1355 = vmul.f32 %v1288, %v1310
        %v1356 = vmul.f32 %v1289, %v1310
        %v1357 = vmul.f32 %v1290, %v1310
        %v1358 = vmul.f32 %v1291, %v1310
        %v1359 = vmul.f32 %v1292, %v1310
        %v1360 = vmul.f32 %v1293, %v1310
        %v1361 = vmul.f32 %v1294, %v1310
        %v1362 = vmul.f32 %v1295, %v1310
        %v1363 = vmul.f32 %v1296, %v1310
        %v1364 = vmul.f32 %v1297, %v1310
        %v1365 = vmul.f32 %v1298, %v1310
        %v1366 = vmul.f32 %v1299, %v1310
        %v1367 = vmul.f32 %v1300, %v1310
        %v1368 = vmul.f32 %v1301, %v1310
        %v1369 = vmul.f32 %v1302, %v1310
        %v1370 = vmul.f32 %v1303, %v1310
        %v1371 = vmul.f32 %v1304, %v1310
        %v1372 = vmul.f32 %v1305, %v1310
        %v1373 = vmul.f32 %v1306, %v1310
        %v1374 = vmul.f32 %v1307, %v1310
        %v1375 = vmul.f32 %v1308, %v1310
        %v1376 = vld [vmem:[%s3] sm:$0x1]
        %v1378 = vperm.slane %v1376, 0
        %v1380 = vadd.f32 %v1312, %v1378
        %v1381 = vadd.f32 %v1313, %v1378
        %v1382 = vadd.f32 %v1314, %v1378
        %v1383 = vadd.f32 %v1315, %v1378
        %v1384 = vadd.f32 %v1316, %v1378
        %v1385 = vadd.f32 %v1317, %v1378
        %v1386 = vadd.f32 %v1318, %v1378
        %v1387 = vadd.f32 %v1319, %v1378
        %v1388 = vadd.f32 %v1320, %v1378
        %v1389 = vadd.f32 %v1321, %v1378
        %v1390 = vadd.f32 %v1322, %v1378
        %v1391 = vadd.f32 %v1323, %v1378
        %v1392 = vadd.f32 %v1324, %v1378
        %v1393 = vadd.f32 %v1325, %v1378
        %v1394 = vadd.f32 %v1326, %v1378
        %v1395 = vadd.f32 %v1327, %v1378
        %v1396 = vadd.f32 %v1328, %v1378
        %v1397 = vadd.f32 %v1329, %v1378
        %v1398 = vadd.f32 %v1330, %v1378
        %v1399 = vadd.f32 %v1331, %v1378
        %v1400 = vadd.f32 %v1332, %v1378
        %v1401 = vadd.f32 %v1333, %v1378
        %v1402 = vadd.f32 %v1334, %v1378
        %v1403 = vadd.f32 %v1335, %v1378
        %v1404 = vadd.f32 %v1336, %v1378
        %v1405 = vadd.f32 %v1337, %v1378
        %v1406 = vadd.f32 %v1338, %v1378
        %v1407 = vadd.f32 %v1339, %v1378
        %v1408 = vadd.f32 %v1340, %v1378
        %v1409 = vadd.f32 %v1341, %v1378
        %v1410 = vadd.f32 %v1342, %v1378
        %v1411 = vadd.f32 %v1343, %v1378
        %v1412 = vadd.f32 %v1344, %v1378
        %v1413 = vadd.f32 %v1345, %v1378
        %v1414 = vadd.f32 %v1346, %v1378
        %v1415 = vadd.f32 %v1347, %v1378
        %v1416 = vadd.f32 %v1348, %v1378
        %v1417 = vadd.f32 %v1349, %v1378
        %v1418 = vadd.f32 %v1350, %v1378
        %v1419 = vadd.f32 %v1351, %v1378
        %v1420 = vadd.f32 %v1352, %v1378
        %v1421 = vadd.f32 %v1353, %v1378
        %v1422 = vadd.f32 %v1354, %v1378
        %v1423 = vadd.f32 %v1355, %v1378
        %v1424 = vadd.f32 %v1356, %v1378
        %v1425 = vadd.f32 %v1357, %v1378
        %v1426 = vadd.f32 %v1358, %v1378
        %v1427 = vadd.f32 %v1359, %v1378
        %v1428 = vadd.f32 %v1360, %v1378
        %v1429 = vadd.f32 %v1361, %v1378
        %v1430 = vadd.f32 %v1362, %v1378
        %v1431 = vadd.f32 %v1363, %v1378
        %v1432 = vadd.f32 %v1364, %v1378
        %v1433 = vadd.f32 %v1365, %v1378
        %v1434 = vadd.f32 %v1366, %v1378
        %v1435 = vadd.f32 %v1367, %v1378
        %v1436 = vadd.f32 %v1368, %v1378
        %v1437 = vadd.f32 %v1369, %v1378
        %v1438 = vadd.f32 %v1370, %v1378
        %v1439 = vadd.f32 %v1371, %v1378
        %v1440 = vadd.f32 %v1372, %v1378
        %v1441 = vadd.f32 %v1373, %v1378
        %v1442 = vadd.f32 %v1374, %v1378
        %v1443 = vadd.f32 %v1375, %v1378
        %v1444 = vld [vmem:[%s4] sm:$0x1]
        %v1445 = vmax.f32 %v1380, 0.0
        %v1446 = vmax.f32 %v1381, 0.0
        %v1447 = vmax.f32 %v1382, 0.0
        %v1448 = vmax.f32 %v1383, 0.0
        %v1449 = vmax.f32 %v1384, 0.0
        %v1450 = vmax.f32 %v1385, 0.0
        %v1451 = vmax.f32 %v1386, 0.0
        %v1452 = vmax.f32 %v1387, 0.0
        %v1453 = vmax.f32 %v1388, 0.0
        %v1454 = vmax.f32 %v1389, 0.0
        %v1455 = vmax.f32 %v1390, 0.0
        %v1456 = vmax.f32 %v1391, 0.0
        %v1457 = vmax.f32 %v1392, 0.0
        %v1458 = vmax.f32 %v1393, 0.0
        %v1459 = vmax.f32 %v1394, 0.0
        %v1460 = vmax.f32 %v1395, 0.0
        %v1461 = vmax.f32 %v1396, 0.0
        %v1462 = vmax.f32 %v1397, 0.0
        %v1463 = vmax.f32 %v1398, 0.0
        %v1464 = vmax.f32 %v1399, 0.0
        %v1465 = vmax.f32 %v1400, 0.0
        %v1466 = vmax.f32 %v1401, 0.0
        %v1467 = vmax.f32 %v1402, 0.0
        %v1468 = vmax.f32 %v1403, 0.0
        %v1469 = vmax.f32 %v1404, 0.0
        %v1470 = vmax.f32 %v1405, 0.0
        %v1471 = vmax.f32 %v1406, 0.0
        %v1472 = vmax.f32 %v1407, 0.0
        %v1473 = vmax.f32 %v1408, 0.0
        %v1474 = vmax.f32 %v1409, 0.0
        %v1475 = vmax.f32 %v1410, 0.0
        %v1476 = vmax.f32 %v1411, 0.0
        %v1477 = vmax.f32 %v1412, 0.0
        %v1478 = vmax.f32 %v1413, 0.0
        %v1479 = vmax.f32 %v1414, 0.0
        %v1480 = vmax.f32 %v1415, 0.0
        %v1481 = vmax.f32 %v1416, 0.0
        %v1482 = vmax.f32 %v1417, 0.0
        %v1483 = vmax.f32 %v1418, 0.0
        %v1484 = vmax.f32 %v1419, 0.0
        %v1485 = vmax.f32 %v1420, 0.0
        %v1486 = vmax.f32 %v1421, 0.0
        %v1487 = vmax.f32 %v1422, 0.0
        %v1488 = vmax.f32 %v1423, 0.0
        %v1489 = vmax.f32 %v1424, 0.0
        %v1490 = vmax.f32 %v1425, 0.0
        %v1491 = vmax.f32 %v1426, 0.0
        %v1492 = vmax.f32 %v1427, 0.0
        %v1493 = vmax.f32 %v1428, 0.0
        %v1494 = vmax.f32 %v1429, 0.0
        %v1495 = vmax.f32 %v1430, 0.0
        %v1496 = vmax.f32 %v1431, 0.0
        %v1497 = vmax.f32 %v1432, 0.0
        %v1498 = vmax.f32 %v1433, 0.0
        %v1499 = vmax.f32 %v1434, 0.0
        %v1500 = vmax.f32 %v1435, 0.0
        %v1501 = vmax.f32 %v1436, 0.0
        %v1502 = vmax.f32 %v1437, 0.0
        %v1503 = vmax.f32 %v1438, 0.0
        %v1504 = vmax.f32 %v1439, 0.0
        %v1505 = vmax.f32 %v1440, 0.0
        %v1506 = vmax.f32 %v1441, 0.0
        %v1507 = vmax.f32 %v1442, 0.0
        %v1508 = vmax.f32 %v1443, 0.0
        %v1510 = vperm.slane %v1444, 0
        %v1512 = vmul.f32 %v1510, %v1445
        %v1513 = vmul.f32 %v1510, %v1446
        %v1514 = vmul.f32 %v1510, %v1447
        %v1515 = vmul.f32 %v1510, %v1448
        %v1516 = vmul.f32 %v1510, %v1449
        %v1517 = vmul.f32 %v1510, %v1450
        %v1518 = vmul.f32 %v1510, %v1451
        %v1519 = vmul.f32 %v1510, %v1452
        %v1520 = vmul.f32 %v1510, %v1453
        %v1521 = vmul.f32 %v1510, %v1454
        %v1522 = vmul.f32 %v1510, %v1455
        %v1523 = vmul.f32 %v1510, %v1456
        %v1524 = vmul.f32 %v1510, %v1457
        %v1525 = vmul.f32 %v1510, %v1458
        %v1526 = vmul.f32 %v1510, %v1459
        %v1527 = vmul.f32 %v1510, %v1460
        %v1528 = vmul.f32 %v1510, %v1461
        %v1529 = vmul.f32 %v1510, %v1462
        %v1530 = vmul.f32 %v1510, %v1463
        %v1531 = vmul.f32 %v1510, %v1464
        %v1532 = vmul.f32 %v1510, %v1465
        %v1533 = vmul.f32 %v1510, %v1466
        %v1534 = vmul.f32 %v1510, %v1467
        %v1535 = vmul.f32 %v1510, %v1468
        %v1536 = vmul.f32 %v1510, %v1469
        %v1537 = vmul.f32 %v1510, %v1470
        %v1538 = vmul.f32 %v1510, %v1471
        %v1539 = vmul.f32 %v1510, %v1472
        %v1540 = vmul.f32 %v1510, %v1473
        %v1541 = vmul.f32 %v1510, %v1474
        %v1542 = vmul.f32 %v1510, %v1475
        %v1543 = vmul.f32 %v1510, %v1476
        %v1544 = vmul.f32 %v1510, %v1477
        %v1545 = vmul.f32 %v1510, %v1478
        %v1546 = vmul.f32 %v1510, %v1479
        %v1547 = vmul.f32 %v1510, %v1480
        %v1548 = vmul.f32 %v1510, %v1481
        %v1549 = vmul.f32 %v1510, %v1482
        %v1550 = vmul.f32 %v1510, %v1483
        %v1551 = vmul.f32 %v1510, %v1484
        %v1552 = vmul.f32 %v1510, %v1485
        %v1553 = vmul.f32 %v1510, %v1486
        %v1554 = vmul.f32 %v1510, %v1487
        %v1555 = vmul.f32 %v1510, %v1488
        %v1556 = vmul.f32 %v1510, %v1489
        %v1557 = vmul.f32 %v1510, %v1490
        %v1558 = vmul.f32 %v1510, %v1491
        %v1559 = vmul.f32 %v1510, %v1492
        %v1560 = vmul.f32 %v1510, %v1493
        %v1561 = vmul.f32 %v1510, %v1494
        %v1562 = vmul.f32 %v1510, %v1495
        %v1563 = vmul.f32 %v1510, %v1496
        %v1564 = vmul.f32 %v1510, %v1497
        %v1565 = vmul.f32 %v1510, %v1498
        %v1566 = vmul.f32 %v1510, %v1499
        %v1567 = vmul.f32 %v1510, %v1500
        %v1568 = vmul.f32 %v1510, %v1501
        %v1569 = vmul.f32 %v1510, %v1502
        %v1570 = vmul.f32 %v1510, %v1503
        %v1571 = vmul.f32 %v1510, %v1504
        %v1572 = vmul.f32 %v1510, %v1505
        %v1573 = vmul.f32 %v1510, %v1506
        %v1574 = vmul.f32 %v1510, %v1507
        %v1575 = vmul.f32 %v1510, %v1508
        %v1576 = vsub.f32 1.0, %v1444
        %v1578 = vperm.slane %v1576, 0
        %v1580 = vmul.f32 %v1578, %v1380
        %v1581 = vmul.f32 %v1578, %v1381
        %v1582 = vmul.f32 %v1578, %v1382
        %v1583 = vmul.f32 %v1578, %v1383
        %v1584 = vmul.f32 %v1578, %v1384
        %v1585 = vmul.f32 %v1578, %v1385
        %v1586 = vmul.f32 %v1578, %v1386
        %v1587 = vmul.f32 %v1578, %v1387
        %v1588 = vmul.f32 %v1578, %v1388
        %v1589 = vmul.f32 %v1578, %v1389
        %v1590 = vmul.f32 %v1578, %v1390
        %v1591 = vmul.f32 %v1578, %v1391
        %v1592 = vmul.f32 %v1578, %v1392
        %v1593 = vmul.f32 %v1578, %v1393
        %v1594 = vmul.f32 %v1578, %v1394
        %v1595 = vmul.f32 %v1578, %v1395
        %v1596 = vmul.f32 %v1578, %v1396
        %v1597 = vmul.f32 %v1578, %v1397
        %v1598 = vmul.f32 %v1578, %v1398
        %v1599 = vmul.f32 %v1578, %v1399
        %v1600 = vmul.f32 %v1578, %v1400
        %v1601 = vmul.f32 %v1578, %v1401
        %v1602 = vmul.f32 %v1578, %v1402
        %v1603 = vmul.f32 %v1578, %v1403
        %v1604 = vmul.f32 %v1578, %v1404
        %v1605 = vmul.f32 %v1578, %v1405
        %v1606 = vmul.f32 %v1578, %v1406
        %v1607 = vmul.f32 %v1578, %v1407
        %v1608 = vmul.f32 %v1578, %v1408
        %v1609 = vmul.f32 %v1578, %v1409
        %v1610 = vmul.f32 %v1578, %v1410
        %v1611 = vmul.f32 %v1578, %v1411
        %v1612 = vmul.f32 %v1578, %v1412
        %v1613 = vmul.f32 %v1578, %v1413
        %v1614 = vmul.f32 %v1578, %v1414
        %v1615 = vmul.f32 %v1578, %v1415
        %v1616 = vmul.f32 %v1578, %v1416
        %v1617 = vmul.f32 %v1578, %v1417
        %v1618 = vmul.f32 %v1578, %v1418
        %v1619 = vmul.f32 %v1578, %v1419
        %v1620 = vmul.f32 %v1578, %v1420
        %v1621 = vmul.f32 %v1578, %v1421
        %v1622 = vmul.f32 %v1578, %v1422
        %v1623 = vmul.f32 %v1578, %v1423
        %v1624 = vmul.f32 %v1578, %v1424
        %v1625 = vmul.f32 %v1578, %v1425
        %v1626 = vmul.f32 %v1578, %v1426
        %v1627 = vmul.f32 %v1578, %v1427
        %v1628 = vmul.f32 %v1578, %v1428
        %v1629 = vmul.f32 %v1578, %v1429
        %v1630 = vmul.f32 %v1578, %v1430
        %v1631 = vmul.f32 %v1578, %v1431
        %v1632 = vmul.f32 %v1578, %v1432
        %v1633 = vmul.f32 %v1578, %v1433
        %v1634 = vmul.f32 %v1578, %v1434
        %v1635 = vmul.f32 %v1578, %v1435
        %v1636 = vmul.f32 %v1578, %v1436
        %v1637 = vmul.f32 %v1578, %v1437
        %v1638 = vmul.f32 %v1578, %v1438
        %v1639 = vmul.f32 %v1578, %v1439
        %v1640 = vmul.f32 %v1578, %v1440
        %v1641 = vmul.f32 %v1578, %v1441
        %v1642 = vmul.f32 %v1578, %v1442
        %v1643 = vmul.f32 %v1578, %v1443
        %v1644 = vadd.f32 %v1512, %v1580
        %v1645 = vadd.f32 %v1513, %v1581
        %v1646 = vadd.f32 %v1514, %v1582
        %v1647 = vadd.f32 %v1515, %v1583
        %v1648 = vadd.f32 %v1516, %v1584
        %v1649 = vadd.f32 %v1517, %v1585
        %v1650 = vadd.f32 %v1518, %v1586
        %v1651 = vadd.f32 %v1519, %v1587
        %v1652 = vadd.f32 %v1520, %v1588
        %v1653 = vadd.f32 %v1521, %v1589
        %v1654 = vadd.f32 %v1522, %v1590
        %v1655 = vadd.f32 %v1523, %v1591
        %v1656 = vadd.f32 %v1524, %v1592
        %v1657 = vadd.f32 %v1525, %v1593
        %v1658 = vadd.f32 %v1526, %v1594
        %v1659 = vadd.f32 %v1527, %v1595
        %v1660 = vadd.f32 %v1528, %v1596
        %v1661 = vadd.f32 %v1529, %v1597
        %v1662 = vadd.f32 %v1530, %v1598
        %v1663 = vadd.f32 %v1531, %v1599
        %v1664 = vadd.f32 %v1532, %v1600
        %v1665 = vadd.f32 %v1533, %v1601
        %v1666 = vadd.f32 %v1534, %v1602
        %v1667 = vadd.f32 %v1535, %v1603
        %v1668 = vadd.f32 %v1536, %v1604
        %v1669 = vadd.f32 %v1537, %v1605
        %v1670 = vadd.f32 %v1538, %v1606
        %v1671 = vadd.f32 %v1539, %v1607
        %v1672 = vadd.f32 %v1540, %v1608
        %v1673 = vadd.f32 %v1541, %v1609
        %v1674 = vadd.f32 %v1542, %v1610
        %v1675 = vadd.f32 %v1543, %v1611
        %v1676 = vadd.f32 %v1544, %v1612
        %v1677 = vadd.f32 %v1545, %v1613
        %v1678 = vadd.f32 %v1546, %v1614
        %v1679 = vadd.f32 %v1547, %v1615
        %v1680 = vadd.f32 %v1548, %v1616
        %v1681 = vadd.f32 %v1549, %v1617
        %v1682 = vadd.f32 %v1550, %v1618
        %v1683 = vadd.f32 %v1551, %v1619
        %v1684 = vadd.f32 %v1552, %v1620
        %v1685 = vadd.f32 %v1553, %v1621
        %v1686 = vadd.f32 %v1554, %v1622
        %v1687 = vadd.f32 %v1555, %v1623
        %v1688 = vadd.f32 %v1556, %v1624
        %v1689 = vadd.f32 %v1557, %v1625
        %v1690 = vadd.f32 %v1558, %v1626
        %v1691 = vadd.f32 %v1559, %v1627
        %v1692 = vadd.f32 %v1560, %v1628
        %v1693 = vadd.f32 %v1561, %v1629
        %v1694 = vadd.f32 %v1562, %v1630
        %v1695 = vadd.f32 %v1563, %v1631
        %v1696 = vadd.f32 %v1564, %v1632
        %v1697 = vadd.f32 %v1565, %v1633
        %v1698 = vadd.f32 %v1566, %v1634
        %v1699 = vadd.f32 %v1567, %v1635
        %v1700 = vadd.f32 %v1568, %v1636
        %v1701 = vadd.f32 %v1569, %v1637
        %v1702 = vadd.f32 %v1570, %v1638
        %v1703 = vadd.f32 %v1571, %v1639
        %v1704 = vadd.f32 %v1572, %v1640
        %v1705 = vadd.f32 %v1573, %v1641
        %v1706 = vadd.f32 %v1574, %v1642
        %v1707 = vadd.f32 %v1575, %v1643
        %v1708 = vpack.c.bf16 %v1644, %v1644
        %v1709 = vpack.c.bf16 %v1645, %v1645
        %v1710 = vpack.c.bf16 %v1646, %v1646
        %v1711 = vpack.c.bf16 %v1647, %v1647
        %v1712 = vpack.c.bf16 %v1648, %v1648
        %v1713 = vpack.c.bf16 %v1649, %v1649
        %v1714 = vpack.c.bf16 %v1650, %v1650
        %v1715 = vpack.c.bf16 %v1651, %v1651
        %v1716 = vpack.c.bf16 %v1652, %v1652
        %v1717 = vpack.c.bf16 %v1653, %v1653
        %v1718 = vpack.c.bf16 %v1654, %v1654
        %v1719 = vpack.c.bf16 %v1655, %v1655
        %v1720 = vpack.c.bf16 %v1656, %v1656
        %v1721 = vpack.c.bf16 %v1657, %v1657
        %v1722 = vpack.c.bf16 %v1658, %v1658
        %v1723 = vpack.c.bf16 %v1659, %v1659
        %v1724 = vpack.c.bf16 %v1660, %v1660
        %v1725 = vpack.c.bf16 %v1661, %v1661
        %v1726 = vpack.c.bf16 %v1662, %v1662
        %v1727 = vpack.c.bf16 %v1663, %v1663
        %v1728 = vpack.c.bf16 %v1664, %v1664
        %v1729 = vpack.c.bf16 %v1665, %v1665
        %v1730 = vpack.c.bf16 %v1666, %v1666
        %v1731 = vpack.c.bf16 %v1667, %v1667
        %v1732 = vpack.c.bf16 %v1668, %v1668
        %v1733 = vpack.c.bf16 %v1669, %v1669
        %v1734 = vpack.c.bf16 %v1670, %v1670
        %v1735 = vpack.c.bf16 %v1671, %v1671
        %v1736 = vpack.c.bf16 %v1672, %v1672
        %v1737 = vpack.c.bf16 %v1673, %v1673
        %v1738 = vpack.c.bf16 %v1674, %v1674
        %v1739 = vpack.c.bf16 %v1675, %v1675
        %v1740 = vpack.c.bf16 %v1676, %v1676
        %v1741 = vpack.c.bf16 %v1677, %v1677
        %v1742 = vpack.c.bf16 %v1678, %v1678
        %v1743 = vpack.c.bf16 %v1679, %v1679
        %v1744 = vpack.c.bf16 %v1680, %v1680
        %v1745 = vpack.c.bf16 %v1681, %v1681
        %v1746 = vpack.c.bf16 %v1682, %v1682
        %v1747 = vpack.c.bf16 %v1683, %v1683
        %v1748 = vpack.c.bf16 %v1684, %v1684
        %v1749 = vpack.c.bf16 %v1685, %v1685
        %v1750 = vpack.c.bf16 %v1686, %v1686
        %v1751 = vpack.c.bf16 %v1687, %v1687
        %v1752 = vpack.c.bf16 %v1688, %v1688
        %v1753 = vpack.c.bf16 %v1689, %v1689
        %v1754 = vpack.c.bf16 %v1690, %v1690
        %v1755 = vpack.c.bf16 %v1691, %v1691
        %v1756 = vpack.c.bf16 %v1692, %v1692
        %v1757 = vpack.c.bf16 %v1693, %v1693
        %v1758 = vpack.c.bf16 %v1694, %v1694
        %v1759 = vpack.c.bf16 %v1695, %v1695
        %v1760 = vpack.c.bf16 %v1696, %v1696
        %v1761 = vpack.c.bf16 %v1697, %v1697
        %v1762 = vpack.c.bf16 %v1698, %v1698
        %v1763 = vpack.c.bf16 %v1699, %v1699
        %v1764 = vpack.c.bf16 %v1700, %v1700
        %v1765 = vpack.c.bf16 %v1701, %v1701
        %v1766 = vpack.c.bf16 %v1702, %v1702
        %v1767 = vpack.c.bf16 %v1703, %v1703
        %v1768 = vpack.c.bf16 %v1704, %v1704
        %v1769 = vpack.c.bf16 %v1705, %v1705
        %v1770 = vpack.c.bf16 %v1706, %v1706
        %v1771 = vpack.c.bf16 %v1707, %v1707
        %vm1772 = vcmask 240640
        %1773 = vst.msk [vmem:[%s238] sm:$0xf] %vm1772, %v1708
        %1774 = vst.msk [vmem:[%s238 + $0x4] sm:$0xf] %vm1772, %v1709
        %1775 = vst.msk [vmem:[%s238 + $0x8] sm:$0xf] %vm1772, %v1710
        %1776 = vst.msk [vmem:[%s238 + $0xc] sm:$0xf] %vm1772, %v1711
        %1777 = vst.msk [vmem:[%s238 + $0x10] sm:$0xf] %vm1772, %v1712
        %1778 = vst.msk [vmem:[%s238 + $0x14] sm:$0xf] %vm1772, %v1713
        %1779 = vst.msk [vmem:[%s238 + $0x18] sm:$0xf] %vm1772, %v1714
        %1780 = vst.msk [vmem:[%s238 + $0x1c] sm:$0xf] %vm1772, %v1715
        %1781 = vst.msk [vmem:[%s238 + $0x20] sm:$0xf] %vm1772, %v1716
        %1782 = vst.msk [vmem:[%s238 + $0x24] sm:$0xf] %vm1772, %v1717
        %1783 = vst.msk [vmem:[%s238 + $0x28] sm:$0xf] %vm1772, %v1718
        %1784 = vst.msk [vmem:[%s238 + $0x2c] sm:$0xf] %vm1772, %v1719
        %1785 = vst.msk [vmem:[%s238 + $0x30] sm:$0xf] %vm1772, %v1720
        %1786 = vst.msk [vmem:[%s238 + $0x34] sm:$0xf] %vm1772, %v1721
        %1787 = vst.msk [vmem:[%s238 + $0x38] sm:$0xf] %vm1772, %v1722
        %1788 = vst.msk [vmem:[%s238 + $0x3c] sm:$0xf] %vm1772, %v1723
        %1789 = vst.msk [vmem:[%s238 + $0x40] sm:$0xf] %vm1772, %v1724
        %1790 = vst.msk [vmem:[%s238 + $0x44] sm:$0xf] %vm1772, %v1725
        %1791 = vst.msk [vmem:[%s238 + $0x48] sm:$0xf] %vm1772, %v1726
        %1792 = vst.msk [vmem:[%s238 + $0x4c] sm:$0xf] %vm1772, %v1727
        %1793 = vst.msk [vmem:[%s238 + $0x50] sm:$0xf] %vm1772, %v1728
        %1794 = vst.msk [vmem:[%s238 + $0x54] sm:$0xf] %vm1772, %v1729
        %1795 = vst.msk [vmem:[%s238 + $0x58] sm:$0xf] %vm1772, %v1730
        %1796 = vst.msk [vmem:[%s238 + $0x5c] sm:$0xf] %vm1772, %v1731
        %1797 = vst.msk [vmem:[%s238 + $0x60] sm:$0xf] %vm1772, %v1732
        %1798 = vst.msk [vmem:[%s238 + $0x64] sm:$0xf] %vm1772, %v1733
        %1799 = vst.msk [vmem:[%s238 + $0x68] sm:$0xf] %vm1772, %v1734
        %1800 = vst.msk [vmem:[%s238 + $0x6c] sm:$0xf] %vm1772, %v1735
        %1801 = vst.msk [vmem:[%s238 + $0x70] sm:$0xf] %vm1772, %v1736
        %1802 = vst.msk [vmem:[%s238 + $0x74] sm:$0xf] %vm1772, %v1737
        %1803 = vst.msk [vmem:[%s238 + $0x78] sm:$0xf] %vm1772, %v1738
        %1804 = vst.msk [vmem:[%s238 + $0x7c] sm:$0xf] %vm1772, %v1739
        %1805 = vst.msk [vmem:[%s238 + $0x80] sm:$0xf] %vm1772, %v1740
        %1806 = vst.msk [vmem:[%s238 + $0x84] sm:$0xf] %vm1772, %v1741
        %1807 = vst.msk [vmem:[%s238 + $0x88] sm:$0xf] %vm1772, %v1742
        %1808 = vst.msk [vmem:[%s238 + $0x8c] sm:$0xf] %vm1772, %v1743
        %1809 = vst.msk [vmem:[%s238 + $0x90] sm:$0xf] %vm1772, %v1744
        %1810 = vst.msk [vmem:[%s238 + $0x94] sm:$0xf] %vm1772, %v1745
        %1811 = vst.msk [vmem:[%s238 + $0x98] sm:$0xf] %vm1772, %v1746
        %1812 = vst.msk [vmem:[%s238 + $0x9c] sm:$0xf] %vm1772, %v1747
        %1813 = vst.msk [vmem:[%s238 + $0xa0] sm:$0xf] %vm1772, %v1748
        %1814 = vst.msk [vmem:[%s238 + $0xa4] sm:$0xf] %vm1772, %v1749
        %1815 = vst.msk [vmem:[%s238 + $0xa8] sm:$0xf] %vm1772, %v1750
        %1816 = vst.msk [vmem:[%s238 + $0xac] sm:$0xf] %vm1772, %v1751
        %1817 = vst.msk [vmem:[%s238 + $0xb0] sm:$0xf] %vm1772, %v1752
        %1818 = vst.msk [vmem:[%s238 + $0xb4] sm:$0xf] %vm1772, %v1753
        %1819 = vst.msk [vmem:[%s238 + $0xb8] sm:$0xf] %vm1772, %v1754
        %1820 = vst.msk [vmem:[%s238 + $0xbc] sm:$0xf] %vm1772, %v1755
        %1821 = vst.msk [vmem:[%s238 + $0xc0] sm:$0xf] %vm1772, %v1756
        %1822 = vst.msk [vmem:[%s238 + $0xc4] sm:$0xf] %vm1772, %v1757
        %1823 = vst.msk [vmem:[%s238 + $0xc8] sm:$0xf] %vm1772, %v1758
        %1824 = vst.msk [vmem:[%s238 + $0xcc] sm:$0xf] %vm1772, %v1759
        %1825 = vst.msk [vmem:[%s238 + $0xd0] sm:$0xf] %vm1772, %v1760
        %1826 = vst.msk [vmem:[%s238 + $0xd4] sm:$0xf] %vm1772, %v1761
        %1827 = vst.msk [vmem:[%s238 + $0xd8] sm:$0xf] %vm1772, %v1762
        %1828 = vst.msk [vmem:[%s238 + $0xdc] sm:$0xf] %vm1772, %v1763
        %1829 = vst.msk [vmem:[%s238 + $0xe0] sm:$0xf] %vm1772, %v1764
        %1830 = vst.msk [vmem:[%s238 + $0xe4] sm:$0xf] %vm1772, %v1765
        %1831 = vst.msk [vmem:[%s238 + $0xe8] sm:$0xf] %vm1772, %v1766
        %1832 = vst.msk [vmem:[%s238 + $0xec] sm:$0xf] %vm1772, %v1767
        %1833 = vst.msk [vmem:[%s238 + $0xf0] sm:$0xf] %vm1772, %v1768
        %1834 = vst.msk [vmem:[%s238 + $0xf4] sm:$0xf] %vm1772, %v1769
        %1835 = vst.msk [vmem:[%s238 + $0xf8] sm:$0xf] %vm1772, %v1770
        %1836 = vst.msk [vmem:[%s238 + $0xfc] sm:$0xf] %vm1772, %v1771
      $region52: #{tpu_custom_call.1} parent=39 // pred_fallthru
        _
      %s1837 = smul.u32 64, %s21
      %p1838 = scmp.lt.s32.totalorder %s1837, 63
      %s1839 = scalar_select %p1838, %s1837, 63
      %s1840 = smul.addr %s1839, 4
      %s1841 = scalar_lea.vmem %s5, %s1840
      // Predicated region
      $region53: #{tpu_custom_call.1} parent=39 // pred_check
        %p1842 = pneg %p156
      $region54: #{tpu_custom_call.1} parent=39 // pred_check_branch
        %1844 = sbr.rel (%p1842) target = $region56
      $region55: #{tpu_custom_call.1} parent=39 // pred_region
        %s1845 = smul.u32 64, %s21
      $region56: #{tpu_custom_call.1} parent=39 // pred_fallthru
        _
      // Predicated region
      $region57: #{tpu_custom_call.1} parent=39 // pred_check
        %p1846 = pneg %p156
      $region58: #{tpu_custom_call.1} parent=39 // pred_check_branch
        %1848 = sbr.rel (%p1846) target = $region60
      $region59: #{tpu_custom_call.1} parent=39 // pred_region
        %s1849 = smul.u32 64, %s21
        %p1850 = scmp.lt.s32.totalorder %s1849, 63
        %s1851 = scalar_select %p1850, %s1849, 63
        %s1852 = smul.addr %s1851, 4
        %s1853 = scalar_lea.vmem %s5, %s1852
      $region60: #{tpu_custom_call.1} parent=39 // pred_fallthru
        _
    $region40: #{tpu_custom_call.1} parent=5 // pred_fallthru
      _
    %p1854 = scmp.le.s32.totalorder 2, %s11
    // Predicated region
    $region61: #{tpu_custom_call.1} parent=5 // pred_check
      %p1855 = pneg %p1854
    $region62: #{tpu_custom_call.1} parent=5 // pred_check_branch
      %1857 = sbr.rel (%p1855) target = $region64
    $region63: #{tpu_custom_call.1} parent=5 // pred_region
      %s1858 = ssub.s32 %s11, 2
    $region64: #{tpu_custom_call.1} parent=5 // pred_fallthru
      _
  $region6: #{tpu_custom_call.1} parent=0 // loop_footer
    %s15 = sadd.s32 1, %s11
  $region7: #{tpu_custom_call.1} parent=0 // loop_footer_branch
    %10 = sbr.rel target = $region3
  $region8: #{tpu_custom_call.1} parent=0 // loop_exit
    _

</llo_original>
